<compile_context>
chip_gen: v7x
topology: tpu7x:2x2x1
jax: 0.10.0
libtpu: 0.0.40
codegen_flags: <defaults>
</compile_context>

<pallas_src>
import functools

import jax
import jax.numpy as jnp
from jax import lax
from jax.experimental import pallas as pl
from jax.experimental.pallas import tpu as pltpu

LANE = 128


def _round_up(n, m):
    return (n + m - 1) // m * m


def _fold_bn(gamma, beta, mean, var, eps=1e-5):
    scale = gamma / jnp.sqrt(var + eps)
    return scale, beta - mean * scale


def _pick_row_tile(H, W, Cmp, budget_bytes=4 * 1024 * 1024):
    """Largest divisor of H whose im2col scratch fits the budget.

    Prefers >= 2 row tiles (so a v7x chip can spread grid steps over both
    TensorCores) and keeps TH*W a multiple of 8 for aligned sublane blocks.
    """
    divs = sorted((d for d in range(1, H + 1) if H % d == 0), reverse=True)
    per_row = W * 9 * Cmp * 2                      # bf16 im2col bytes per image row
    th = next((d for d in divs if d * per_row <= budget_bytes), 1)
    if th == H and H > 1:
        th = next((d for d in divs if d < H), th)  # force >= 2 tiles when possible
    if (th * W) % 8 != 0:
        th = H                                     # fall back to whole-image tiles
    return th


def _vmem_limit_bytes():
    try:
        cap = int(pltpu.get_tpu_info().vmem_capacity_bytes)
    except Exception:
        cap = 64 * 1024 * 1024
    # ~75% of physical VMEM: 48 MiB on v7x (64 MiB), 96 MiB on v5e/v6e (128 MiB).
    return max(32 * 1024 * 1024, min(cap * 3 // 4, 112 * 1024 * 1024))


def _resblock_kernel(x_ref, halo_ref, w1_ref, b1_ref, w2_ref, b2_ref, o_ref,
                     h1e_ref, col_ref, *, TH, W, Cp, Cmp):
    """One (batch, row-tile) grid step.

    x_ref   : (1, TH*W, Cp)      bf16  tile rows, channels lane-dense
    halo_ref: (1, 1, 2*W, Cp)    bf16  row above (first W) / below (last W) the tile
    w1_ref  : (Cp, Cmp)          bf16  1x1 weight, BN1 scale folded in
    b1_ref  : (1, Cmp)           f32
    w2_ref  : (9*Cmp, Cp)        bf16  im2col weight (tap-major rows), BN2 folded in
    b2_ref  : (1, Cp)            f32
    o_ref   : (1, TH*W, Cp)      f32
    h1e_ref : ((TH+2)*W, Cmp)    f32   halo-extended conv1 output (flat rows)
    col_ref : (TH*W, 9*Cmp)      bf16  im2col operand
    """
    THW = TH * W
    Q = (TH + 2) * W

    x_t = x_ref[0]                               # (THW, Cp) bf16
    halo = halo_ref[0, 0]                        # (2W, Cp)  bf16

    def conv1(v):                                # 1x1 conv + BN1 bias + LeakyReLU
        h = jnp.dot(v, w1_ref[...], preferred_element_type=jnp.float32)
        h = h + b1_ref[...]
        return jnp.where(h > 0, h, 0.1 * h)

    # ---- conv1 on halo rows (2W rows) and on the tile interior (TH*W rows) ----
    hh = conv1(halo)                             # (2W, Cmp) f32
    h1e_ref[0:W, :] = hh[0:W, :]                 # row above the tile (zeros at image top)
    h1e_ref[W + THW:Q, :] = hh[W:2 * W, :]       # row below the tile (zeros at image bottom)
    h1e_ref[W:W + THW, :] = conv1(x_t)           # tile interior

    # ---- im2col via XLU rolls of the flat extended array + column masks -------
    h1e = h1e_ref[...]                           # (Q, Cmp) f32
    xi = lax.broadcasted_iota(jnp.int32, (THW, 1), 0) % W   # output column index

    for ky in range(3):
        for kx in range(3):
            tap = ky * 3 + kx
            src = ky * W + (kx - 1)              # source offset into the extended array
            amt = (-src) % Q
            rolled = h1e if amt == 0 else pltpu.roll(h1e, amt, axis=0)
            t = rolled[:THW, :]
            if kx == 0:                          # tap reads column x-1
                t = jnp.where(xi >= 1, t, jnp.zeros_like(t))
            elif kx == 2:                        # tap reads column x+1
                t = jnp.where(xi <= W - 2, t, jnp.zeros_like(t))
            col_ref[:, tap * Cmp:(tap + 1) * Cmp] = t.astype(jnp.bfloat16)

    # ---- conv2 (3x3, pad 1) as one deep-K matmul; BN2 bias + LeakyReLU --------
    y = jnp.dot(col_ref[...], w2_ref[...], preferred_element_type=jnp.float32)
    y = y + b2_ref[...]
    y = jnp.where(y > 0, y, 0.1 * y)

    # ---- residual add in f32, lane-dense store --------------------------------
    o_ref[0] = (x_t.astype(jnp.float32) + y).astype(o_ref.dtype)


def residual_block(x_nchw, w1_oihw, bn1, w2_oihw, bn2, eps=1e-5, row_tile=None):
    """DarkNet ResidualBlock forward (inference-mode BatchNorm).

    x_nchw : (B, C, H, W) float32
    w1_oihw: (Cm, C, 1, 1) conv1 weight (bias=False)
    w2_oihw: (C, Cm, 3, 3) conv2 weight (bias=False)
    bn1/bn2: tuples (gamma, beta, running_mean, running_var)
    Returns (B, C, H, W) float32.
    """
    B, C, H, W = x_nchw.shape
    Cm = w1_oihw.shape[0]
    HW = H * W
    Cp, Cmp = _round_up(C, LANE), _round_up(Cm, LANE)

    TH = row_tile if row_tile is not None else _pick_row_tile(H, W, Cmp)
    if H % TH != 0 or ((TH * W) % 8 != 0 and TH != H):
        TH = H
    n_tiles = H // TH
    THW = TH * W

    s1, b1 = _fold_bn(*bn1, eps)
    s2, b2 = _fold_bn(*bn2, eps)

    # Fold BN scales into conv weights; bring weights into matmul layout.
    w1 = w1_oihw[:, :, 0, 0].T * s1[None, :]                   # (C, Cm)
    w2 = jnp.transpose(w2_oihw, (2, 3, 1, 0)) * s2             # (3,3,Cm,C) HWIO

    # Zero-pad channels to lane-dense multiples of 128; bf16 matmul operands.
    w1p = (jnp.zeros((Cp, Cmp), jnp.float32).at[:C, :Cm].set(w1)
           .astype(jnp.bfloat16))
    w2p = (jnp.zeros((3, 3, Cmp, Cp), jnp.float32).at[:, :, :Cm, :C].set(w2)
           .reshape(9 * Cmp, Cp).astype(jnp.bfloat16))          # tap-major rows
    b1p = jnp.zeros((1, Cmp), jnp.float32).at[0, :Cm].set(b1)
    b2p = jnp.zeros((1, Cp), jnp.float32).at[0, :C].set(b2)

    # NCHW -> lane-dense bf16 (B, H*W, Cp): channels on lanes, spatial on sublanes.
    x_nhwc = jnp.transpose(x_nchw, (0, 2, 3, 1))
    x_pad = jnp.pad(x_nhwc, ((0, 0), (0, 0), (0, 0), (0, Cp - C))).astype(jnp.bfloat16)
    xp = x_pad.reshape(B, HW, Cp)

    # Per-tile halo rows: row above and row below each tile (zeros at image edges).
    xrows = jnp.pad(x_pad, ((0, 0), (1, 1), (0, 0), (0, 0)))    # (B, H+2, W, Cp)
    top_idx = jnp.arange(n_tiles) * TH                          # padded index of row tile_start-1
    bot_idx = (jnp.arange(n_tiles) + 1) * TH + 1                # padded index of row tile_end
    halo = jnp.stack([jnp.take(xrows, top_idx, axis=1),
                      jnp.take(xrows, bot_idx, axis=1)], axis=2)
    halo = halo.reshape(B, n_tiles, 2 * W, Cp)                  # bf16

    kernel = functools.partial(_resblock_kernel, TH=TH, W=W, Cp=Cp, Cmp=Cmp)

    def const_spec(shape):
        # Constant-block weight/bias: single-buffered, DMA'd once.
        return pl.BlockSpec(shape, lambda b, i: (0,) * len(shape),
                            pipeline_mode=pl.Buffered(buffer_count=1))

    out = pl.pallas_call(
        kernel,
        out_shape=jax.ShapeDtypeStruct((B, HW, Cp), jnp.float32),
        grid_spec=pltpu.PrefetchScalarGridSpec(
            num_scalar_prefetch=0,
            grid=(B, n_tiles),
            in_specs=[
                pl.BlockSpec((1, THW, Cp), lambda b, i: (b, i, 0)),         # x tile
                pl.BlockSpec((1, 1, 2 * W, Cp), lambda b, i: (b, i, 0, 0)), # halo rows
                const_spec((Cp, Cmp)),        # w1 (BN1 folded, bf16)
                const_spec((1, Cmp)),         # bn1 bias (f32)
                const_spec((9 * Cmp, Cp)),    # w2 (im2col weight, BN2 folded, bf16)
                const_spec((1, Cp)),          # bn2 bias (f32)
            ],
            out_specs=pl.BlockSpec((1, THW, Cp), lambda b, i: (b, i, 0)),
            scratch_shapes=[
                pltpu.VMEM(((TH + 2) * W, Cmp), jnp.float32),   # halo-extended conv1 out
                pltpu.VMEM((THW, 9 * Cmp), jnp.bfloat16),       # im2col operand
            ],
        ),
        compiler_params=pltpu.CompilerParams(
            dimension_semantics=("parallel", "parallel"),
            vmem_limit_bytes=_vmem_limit_bytes()),
    )(xp, halo, w1p, b1p, w2p, b2p)

    # lane-dense (B, HW, Cp) -> NCHW, drop channel padding.
    return jnp.transpose(out.reshape(B, H, W, Cp)[..., :C], (0, 3, 1, 2))


def _reference(x_nchw, w1_oihw, bn1, w2_oihw, bn2, eps=1e-5):
    """Plain-JAX NCHW reference for correctness checking."""
    def lrelu(v):
        return jnp.where(v > 0, v, 0.1 * v)

    def bn(v, gamma, beta, mean, var):
        s = gamma / jnp.sqrt(var + eps)
        b = beta - mean * s
        return v * s[None, :, None, None] + b[None, :, None, None]

    h = lax.conv_general_dilated(x_nchw, w1_oihw, (1, 1), 'VALID',
                                 dimension_numbers=('NCHW', 'OIHW', 'NCHW'))
    h = lrelu(bn(h, *bn1))
    y = lax.conv_general_dilated(h, w2_oihw, (1, 1), ((1, 1), (1, 1)),
                                 dimension_numbers=('NCHW', 'OIHW', 'NCHW'))
    y = lrelu(bn(y, *bn2))
    return x_nchw + y


if __name__ == "__main__":
    key = jax.random.PRNGKey(0)
    B, C, H, W = 2, 4, 16, 16          # NCHW, matches nn.Conv2d conventions
    Cm = C // 2

    ks = jax.random.split(key, 11)
    x = jax.random.normal(ks[0], (B, C, H, W), jnp.float32)

    # conv1: 1x1, (C_out=Cm, C_in=C, 1, 1);  conv2: 3x3, (C_out=C, C_in=Cm, 3, 3)
    w1 = 0.3 * jax.random.normal(ks[1], (Cm, C, 1, 1), jnp.float32)
    w2 = 0.3 * jax.random.normal(ks[2], (C, Cm, 3, 3), jnp.float32)

    # BatchNorm params (inference mode)
    bn1 = (1.0 + 0.1 * jax.random.normal(ks[3], (Cm,), jnp.float32),
           0.1 * jax.random.normal(ks[4], (Cm,), jnp.float32),
           0.1 * jax.random.normal(ks[5], (Cm,), jnp.float32),
           1.0 + 0.1 * jax.random.uniform(ks[6], (Cm,), jnp.float32))
    bn2 = (1.0 + 0.1 * jax.random.normal(ks[7], (C,), jnp.float32),
           0.1 * jax.random.normal(ks[8], (C,), jnp.float32),
           0.1 * jax.random.normal(ks[9], (C,), jnp.float32),
           1.0 + 0.1 * jax.random.uniform(ks[10], (C,), jnp.float32))

    out = residual_block(x, w1, bn1, w2, bn2)
    jax.block_until_ready(out)

    ref = _reference(x, w1, bn1, w2, bn2)
    err = float(jnp.max(jnp.abs(out - ref)))
    # Tolerance accounts for bf16 activation streaming / bf16 matmul operands
    # (f32 accumulation).
    assert err < 5e-2, err

    print("KERNEL_OK")
</pallas_src>

<mosaic_0001>
module attributes {stable_mosaic.version = 11 : i64} {
  func.func @_resblock_kernel(%arg0: i32, %arg1: i32, %arg2: memref<1x128x128xbf16, #tpu.memory_space<vmem>>, %arg3: memref<1x1x32x128xbf16, #tpu.memory_space<vmem>>, %arg4: memref<128x128xbf16, #tpu.memory_space<vmem>>, %arg5: memref<1x128xf32, #tpu.memory_space<vmem>>, %arg6: memref<1152x128xbf16, #tpu.memory_space<vmem>>, %arg7: memref<1x128xf32, #tpu.memory_space<vmem>>, %arg8: memref<1x128x128xf32, #tpu.memory_space<vmem>>, %arg9: memref<160x128xf32, #tpu.memory_space<vmem>>, %arg10: memref<128x1152xbf16, #tpu.memory_space<vmem>>) attributes {dimension_semantics = [#tpu.dimension_semantics<parallel>, #tpu.dimension_semantics<parallel>], iteration_bounds = array<i64: 2, 2>, scalar_prefetch = 0 : i64, scratch_operands = 2 : i64, tpu.core_type = #tpu.core_type<tc>, window_params = [{transform_indices = @transform_0, window_bounds = array<i64: 1, 128, 128>}, {transform_indices = @transform_1, window_bounds = array<i64: 1, 1, 32, 128>}, {pipeline_mode = #tpu.pipeline_mode<synchronous>, transform_indices = @transform_2, window_bounds = array<i64: 128, 128>}, {pipeline_mode = #tpu.pipeline_mode<synchronous>, transform_indices = @transform_3, window_bounds = array<i64: 1, 128>}, {pipeline_mode = #tpu.pipeline_mode<synchronous>, transform_indices = @transform_4, window_bounds = array<i64: 1152, 128>}, {pipeline_mode = #tpu.pipeline_mode<synchronous>, transform_indices = @transform_5, window_bounds = array<i64: 1, 128>}, {transform_indices = @transform_6, window_bounds = array<i64: 1, 128, 128>}]} {
    %c0 = arith.constant 0 : index
    %c0_0 = arith.constant 0 : index
    %c0_1 = arith.constant 0 : index
    %0 = vector.load %arg2[%c0, %c0_0, %c0_1] : memref<1x128x128xbf16, #tpu.memory_space<vmem>>, vector<1x128x128xbf16>
    %1 = vector.shape_cast %0 : vector<1x128x128xbf16> to vector<128x128xbf16>
    %c0_2 = arith.constant 0 : index
    %c0_3 = arith.constant 0 : index
    %c0_4 = arith.constant 0 : index
    %c0_5 = arith.constant 0 : index
    %2 = vector.load %arg3[%c0_2, %c0_3, %c0_4, %c0_5] : memref<1x1x32x128xbf16, #tpu.memory_space<vmem>>, vector<1x1x32x128xbf16>
    %3 = vector.shape_cast %2 : vector<1x1x32x128xbf16> to vector<32x128xbf16>
    %c0_6 = arith.constant 0 : index
    %c0_7 = arith.constant 0 : index
    %4 = vector.load %arg4[%c0_6, %c0_7] : memref<128x128xbf16, #tpu.memory_space<vmem>>, vector<128x128xbf16>
    %cst = arith.constant dense<0.000000e+00> : vector<32x128xf32>
    %5 = tpu.matmul %3, %4, %cst {dimension_numbers = #tpu.dot_dimension_numbers<[1], [0], [0], [1], [0, 0, 1, 1], [], []>} : vector<32x128xbf16>, vector<128x128xbf16>, vector<32x128xf32> -> vector<32x128xf32>
    %c0_8 = arith.constant 0 : index
    %c0_9 = arith.constant 0 : index
    %6 = vector.load %arg5[%c0_8, %c0_9] : memref<1x128xf32, #tpu.memory_space<vmem>>, vector<1x128xf32>
    %7 = vector.broadcast %6 : vector<1x128xf32> to vector<32x128xf32>
    %8 = arith.addf %5, %7 : vector<32x128xf32>
    %cst_10 = arith.constant 0.000000e+00 : f32
    %9 = vector.broadcast %cst_10 : f32 to vector<32x128xf32>
    %10 = arith.cmpf ogt, %8, %9 : vector<32x128xf32>
    %cst_11 = arith.constant 1.000000e-01 : f32
    %11 = vector.broadcast %cst_11 : f32 to vector<32x128xf32>
    %12 = arith.mulf %11, %8 : vector<32x128xf32>
    %13 = arith.select %10, %8, %12 : vector<32x128xi1>, vector<32x128xf32>
    %14 = vector.extract_strided_slice %13 {offsets = [0, 0], sizes = [16, 128], strides = [1, 1]} : vector<32x128xf32> to vector<16x128xf32>
    %c0_12 = arith.constant 0 : index
    %c0_13 = arith.constant 0 : index
    %15 = vector.load %arg9[%c0_12, %c0_13] : memref<160x128xf32, #tpu.memory_space<vmem>>, vector<16x128xf32>
    tpu.vector_store %arg9[%c0_12, %c0_13], %14 {strides = array<i32>} : memref<160x128xf32, #tpu.memory_space<vmem>>, vector<16x128xf32>,
    %16 = vector.extract_strided_slice %13 {offsets = [16, 0], sizes = [16, 128], strides = [1, 1]} : vector<32x128xf32> to vector<16x128xf32>
    %c144 = arith.constant 144 : index
    %c0_14 = arith.constant 0 : index
    %17 = vector.load %arg9[%c144, %c0_14] : memref<160x128xf32, #tpu.memory_space<vmem>>, vector<16x128xf32>
    tpu.vector_store %arg9[%c144, %c0_14], %16 {strides = array<i32>} : memref<160x128xf32, #tpu.memory_space<vmem>>, vector<16x128xf32>,
    %c0_15 = arith.constant 0 : index
    %c0_16 = arith.constant 0 : index
    %18 = vector.load %arg4[%c0_15, %c0_16] : memref<128x128xbf16, #tpu.memory_space<vmem>>, vector<128x128xbf16>
    %cst_17 = arith.constant dense<0.000000e+00> : vector<128x128xf32>
    %19 = tpu.matmul %1, %18, %cst_17 {dimension_numbers = #tpu.dot_dimension_numbers<[1], [0], [0], [1], [0, 0, 1, 1], [], []>} : vector<128x128xbf16>, vector<128x128xbf16>, vector<128x128xf32> -> vector<128x128xf32>
    %c0_18 = arith.constant 0 : index
    %c0_19 = arith.constant 0 : index
    %20 = vector.load %arg5[%c0_18, %c0_19] : memref<1x128xf32, #tpu.memory_space<vmem>>, vector<1x128xf32>
    %21 = vector.broadcast %20 : vector<1x128xf32> to vector<128x128xf32>
    %22 = arith.addf %19, %21 : vector<128x128xf32>
    %cst_20 = arith.constant 0.000000e+00 : f32
    %23 = vector.broadcast %cst_20 : f32 to vector<128x128xf32>
    %24 = arith.cmpf ogt, %22, %23 : vector<128x128xf32>
    %cst_21 = arith.constant 1.000000e-01 : f32
    %25 = vector.broadcast %cst_21 : f32 to vector<128x128xf32>
    %26 = arith.mulf %25, %22 : vector<128x128xf32>
    %27 = arith.select %24, %22, %26 : vector<128x128xi1>, vector<128x128xf32>
    %c16 = arith.constant 16 : index
    %c0_22 = arith.constant 0 : index
    %28 = vector.load %arg9[%c16, %c0_22] : memref<160x128xf32, #tpu.memory_space<vmem>>, vector<128x128xf32>
    tpu.vector_store %arg9[%c16, %c0_22], %27 {strides = array<i32>} : memref<160x128xf32, #tpu.memory_space<vmem>>, vector<128x128xf32>,
    %c0_23 = arith.constant 0 : index
    %c0_24 = arith.constant 0 : index
    %29 = vector.load %arg9[%c0_23, %c0_24] : memref<160x128xf32, #tpu.memory_space<vmem>>, vector<160x128xf32>
    %30 = tpu.iota {dimensions = array<i32: 0>} : vector<128x1xi32>
    %c16_i32 = arith.constant 16 : i32
    %c0_i32 = arith.constant 0 : i32
    %31 = arith.cmpi eq, %c16_i32, %c0_i32 : i32
    %c1_i32 = arith.constant 1 : i32
    %32 = arith.select %31, %c1_i32, %c16_i32 : i32
    %33 = vector.broadcast %32 : i32 to vector<128x1xi32>
    %34 = arith.remsi %30, %33 : vector<128x1xi32>
    %c0_i32_25 = arith.constant 0 : i32
    %35 = vector.broadcast %c0_i32_25 : i32 to vector<128x1xi32>
    %36 = arith.cmpi ne, %34, %35 : vector<128x1xi32>
    %c0_i32_26 = arith.constant 0 : i32
    %37 = vector.broadcast %c0_i32_26 : i32 to vector<128x1xi32>
    %38 = arith.cmpi slt, %34, %37 : vector<128x1xi32>
    %c0_i32_27 = arith.constant 0 : i32
    %39 = arith.cmpi slt, %32, %c0_i32_27 : i32
    %40 = vector.broadcast %39 : i1 to vector<128x1xi1>
    %41 = vector.broadcast %40 : vector<128x1xi1> to vector<128x1xi1>
    %42 = arith.xori %38, %41 : vector<128x1xi1>
    %43 = arith.andi %42, %36 : vector<128x1xi1>
    %44 = vector.broadcast %32 : i32 to vector<128x1xi32>
    %45 = arith.addi %34, %44 : vector<128x1xi32>
    %46 = arith.select %43, %45, %34 : vector<128x1xi1>, vector<128x1xi32>
    %c1_i32_28 = arith.constant 1 : i32
    %47 = tpu.dynamic_rotate %29 by %c1_i32_28 dim 0 : vector<160x128xf32>, i32 -> vector<160x128xf32>
    %48 = vector.extract_strided_slice %47 {offsets = [0, 0], sizes = [128, 128], strides = [1, 1]} : vector<160x128xf32> to vector<128x128xf32>
    %c1_i32_29 = arith.constant 1 : i32
    %49 = vector.broadcast %c1_i32_29 : i32 to vector<128x1xi32>
    %50 = arith.cmpi sge, %46, %49 : vector<128x1xi32>
    %cst_30 = arith.constant 0.000000e+00 : f32
    %51 = vector.broadcast %cst_30 : f32 to vector<128x128xf32>
    %52 = vector.shape_cast %50 : vector<128x1xi1> to vector<128x1xi1>
    %53 = vector.broadcast %52 : vector<128x1xi1> to vector<128x128xi1>
    %54 = arith.select %53, %48, %51 : vector<128x128xi1>, vector<128x128xf32>
    %55 = arith.truncf %54 : vector<128x128xf32> to vector<128x128xbf16>
    %c0_31 = arith.constant 0 : index
    %c0_32 = arith.constant 0 : index
    %56 = vector.load %arg10[%c0_31, %c0_32] : memref<128x1152xbf16, #tpu.memory_space<vmem>>, vector<128x128xbf16>
    tpu.vector_store %arg10[%c0_31, %c0_32], %55 {strides = array<i32>} : memref<128x1152xbf16, #tpu.memory_space<vmem>>, vector<128x128xbf16>,
    %57 = vector.extract_strided_slice %29 {offsets = [0, 0], sizes = [128, 128], strides = [1, 1]} : vector<160x128xf32> to vector<128x128xf32>
    %58 = arith.truncf %57 : vector<128x128xf32> to vector<128x128xbf16>
    %c0_33 = arith.constant 0 : index
    %c128 = arith.constant 128 : index
    %59 = vector.load %arg10[%c0_33, %c128] : memref<128x1152xbf16, #tpu.memory_space<vmem>>, vector<128x128xbf16>
    tpu.vector_store %arg10[%c0_33, %c128], %58 {strides = array<i32>} : memref<128x1152xbf16, #tpu.memory_space<vmem>>, vector<128x128xbf16>,
    %c159_i32 = arith.constant 159 : i32
    %60 = tpu.dynamic_rotate %29 by %c159_i32 dim 0 : vector<160x128xf32>, i32 -> vector<160x128xf32>
    %61 = vector.extract_strided_slice %60 {offsets = [0, 0], sizes = [128, 128], strides = [1, 1]} : vector<160x128xf32> to vector<128x128xf32>
    %c14_i32 = arith.constant 14 : i32
    %62 = vector.broadcast %c14_i32 : i32 to vector<128x1xi32>
    %63 = arith.cmpi sle, %46, %62 : vector<128x1xi32>
    %cst_34 = arith.constant 0.000000e+00 : f32
    %64 = vector.broadcast %cst_34 : f32 to vector<128x128xf32>
    %65 = vector.shape_cast %63 : vector<128x1xi1> to vector<128x1xi1>
    %66 = vector.broadcast %65 : vector<128x1xi1> to vector<128x128xi1>
    %67 = arith.select %66, %61, %64 : vector<128x128xi1>, vector<128x128xf32>
    %68 = arith.truncf %67 : vector<128x128xf32> to vector<128x128xbf16>
    %c0_35 = arith.constant 0 : index
    %c256 = arith.constant 256 : index
    %69 = vector.load %arg10[%c0_35, %c256] : memref<128x1152xbf16, #tpu.memory_space<vmem>>, vector<128x128xbf16>
    tpu.vector_store %arg10[%c0_35, %c256], %68 {strides = array<i32>} : memref<128x1152xbf16, #tpu.memory_space<vmem>>, vector<128x128xbf16>,
    %c145_i32 = arith.constant 145 : i32
    %70 = tpu.dynamic_rotate %29 by %c145_i32 dim 0 : vector<160x128xf32>, i32 -> vector<160x128xf32>
    %71 = vector.extract_strided_slice %70 {offsets = [0, 0], sizes = [128, 128], strides = [1, 1]} : vector<160x128xf32> to vector<128x128xf32>
    %c1_i32_36 = arith.constant 1 : i32
    %72 = vector.broadcast %c1_i32_36 : i32 to vector<128x1xi32>
    %73 = arith.cmpi sge, %46, %72 : vector<128x1xi32>
    %cst_37 = arith.constant 0.000000e+00 : f32
    %74 = vector.broadcast %cst_37 : f32 to vector<128x128xf32>
    %75 = vector.shape_cast %73 : vector<128x1xi1> to vector<128x1xi1>
    %76 = vector.broadcast %75 : vector<128x1xi1> to vector<128x128xi1>
    %77 = arith.select %76, %71, %74 : vector<128x128xi1>, vector<128x128xf32>
    %78 = arith.truncf %77 : vector<128x128xf32> to vector<128x128xbf16>
    %c0_38 = arith.constant 0 : index
    %c384 = arith.constant 384 : index
    %79 = vector.load %arg10[%c0_38, %c384] : memref<128x1152xbf16, #tpu.memory_space<vmem>>, vector<128x128xbf16>
    tpu.vector_store %arg10[%c0_38, %c384], %78 {strides = array<i32>} : memref<128x1152xbf16, #tpu.memory_space<vmem>>, vector<128x128xbf16>,
    %c144_i32 = arith.constant 144 : i32
    %80 = tpu.dynamic_rotate %29 by %c144_i32 dim 0 : vector<160x128xf32>, i32 -> vector<160x128xf32>
    %81 = vector.extract_strided_slice %80 {offsets = [0, 0], sizes = [128, 128], strides = [1, 1]} : vector<160x128xf32> to vector<128x128xf32>
    %82 = arith.truncf %81 : vector<128x128xf32> to vector<128x128xbf16>
    %c0_39 = arith.constant 0 : index
    %c512 = arith.constant 512 : index
    %83 = vector.load %arg10[%c0_39, %c512] : memref<128x1152xbf16, #tpu.memory_space<vmem>>, vector<128x128xbf16>
    tpu.vector_store %arg10[%c0_39, %c512], %82 {strides = array<i32>} : memref<128x1152xbf16, #tpu.memory_space<vmem>>, vector<128x128xbf16>,
    %c143_i32 = arith.constant 143 : i32
    %84 = tpu.dynamic_rotate %29 by %c143_i32 dim 0 : vector<160x128xf32>, i32 -> vector<160x128xf32>
    %85 = vector.extract_strided_slice %84 {offsets = [0, 0], sizes = [128, 128], strides = [1, 1]} : vector<160x128xf32> to vector<128x128xf32>
    %c14_i32_40 = arith.constant 14 : i32
    %86 = vector.broadcast %c14_i32_40 : i32 to vector<128x1xi32>
    %87 = arith.cmpi sle, %46, %86 : vector<128x1xi32>
    %cst_41 = arith.constant 0.000000e+00 : f32
    %88 = vector.broadcast %cst_41 : f32 to vector<128x128xf32>
    %89 = vector.shape_cast %87 : vector<128x1xi1> to vector<128x1xi1>
    %90 = vector.broadcast %89 : vector<128x1xi1> to vector<128x128xi1>
    %91 = arith.select %90, %85, %88 : vector<128x128xi1>, vector<128x128xf32>
    %92 = arith.truncf %91 : vector<128x128xf32> to vector<128x128xbf16>
    %c0_42 = arith.constant 0 : index
    %c640 = arith.constant 640 : index
    %93 = vector.load %arg10[%c0_42, %c640] : memref<128x1152xbf16, #tpu.memory_space<vmem>>, vector<128x128xbf16>
    tpu.vector_store %arg10[%c0_42, %c640], %92 {strides = array<i32>} : memref<128x1152xbf16, #tpu.memory_space<vmem>>, vector<128x128xbf16>,
    %c129_i32 = arith.constant 129 : i32
    %94 = tpu.dynamic_rotate %29 by %c129_i32 dim 0 : vector<160x128xf32>, i32 -> vector<160x128xf32>
    %95 = vector.extract_strided_slice %94 {offsets = [0, 0], sizes = [128, 128], strides = [1, 1]} : vector<160x128xf32> to vector<128x128xf32>
    %c1_i32_43 = arith.constant 1 : i32
    %96 = vector.broadcast %c1_i32_43 : i32 to vector<128x1xi32>
    %97 = arith.cmpi sge, %46, %96 : vector<128x1xi32>
    %cst_44 = arith.constant 0.000000e+00 : f32
    %98 = vector.broadcast %cst_44 : f32 to vector<128x128xf32>
    %99 = vector.shape_cast %97 : vector<128x1xi1> to vector<128x1xi1>
    %100 = vector.broadcast %99 : vector<128x1xi1> to vector<128x128xi1>
    %101 = arith.select %100, %95, %98 : vector<128x128xi1>, vector<128x128xf32>
    %102 = arith.truncf %101 : vector<128x128xf32> to vector<128x128xbf16>
    %c0_45 = arith.constant 0 : index
    %c768 = arith.constant 768 : index
    %103 = vector.load %arg10[%c0_45, %c768] : memref<128x1152xbf16, #tpu.memory_space<vmem>>, vector<128x128xbf16>
    tpu.vector_store %arg10[%c0_45, %c768], %102 {strides = array<i32>} : memref<128x1152xbf16, #tpu.memory_space<vmem>>, vector<128x128xbf16>,
    %c128_i32 = arith.constant 128 : i32
    %104 = tpu.dynamic_rotate %29 by %c128_i32 dim 0 : vector<160x128xf32>, i32 -> vector<160x128xf32>
    %105 = vector.extract_strided_slice %104 {offsets = [0, 0], sizes = [128, 128], strides = [1, 1]} : vector<160x128xf32> to vector<128x128xf32>
    %106 = arith.truncf %105 : vector<128x128xf32> to vector<128x128xbf16>
    %c0_46 = arith.constant 0 : index
    %c896 = arith.constant 896 : index
    %107 = vector.load %arg10[%c0_46, %c896] : memref<128x1152xbf16, #tpu.memory_space<vmem>>, vector<128x128xbf16>
    tpu.vector_store %arg10[%c0_46, %c896], %106 {strides = array<i32>} : memref<128x1152xbf16, #tpu.memory_space<vmem>>, vector<128x128xbf16>,
    %c127_i32 = arith.constant 127 : i32
    %108 = tpu.dynamic_rotate %29 by %c127_i32 dim 0 : vector<160x128xf32>, i32 -> vector<160x128xf32>
    %109 = vector.extract_strided_slice %108 {offsets = [0, 0], sizes = [128, 128], strides = [1, 1]} : vector<160x128xf32> to vector<128x128xf32>
    %c14_i32_47 = arith.constant 14 : i32
    %110 = vector.broadcast %c14_i32_47 : i32 to vector<128x1xi32>
    %111 = arith.cmpi sle, %46, %110 : vector<128x1xi32>
    %cst_48 = arith.constant 0.000000e+00 : f32
    %112 = vector.broadcast %cst_48 : f32 to vector<128x128xf32>
    %113 = vector.shape_cast %111 : vector<128x1xi1> to vector<128x1xi1>
    %114 = vector.broadcast %113 : vector<128x1xi1> to vector<128x128xi1>
    %115 = arith.select %114, %109, %112 : vector<128x128xi1>, vector<128x128xf32>
    %116 = arith.truncf %115 : vector<128x128xf32> to vector<128x128xbf16>
    %c0_49 = arith.constant 0 : index
    %c1024 = arith.constant 1024 : index
    %117 = vector.load %arg10[%c0_49, %c1024] : memref<128x1152xbf16, #tpu.memory_space<vmem>>, vector<128x128xbf16>
    tpu.vector_store %arg10[%c0_49, %c1024], %116 {strides = array<i32>} : memref<128x1152xbf16, #tpu.memory_space<vmem>>, vector<128x128xbf16>,
    %c0_50 = arith.constant 0 : index
    %c0_51 = arith.constant 0 : index
    %118 = vector.load %arg10[%c0_50, %c0_51] : memref<128x1152xbf16, #tpu.memory_space<vmem>>, vector<128x1152xbf16>
    %c0_52 = arith.constant 0 : index
    %c0_53 = arith.constant 0 : index
    %119 = vector.load %arg6[%c0_52, %c0_53] : memref<1152x128xbf16, #tpu.memory_space<vmem>>, vector<1152x128xbf16>
    %cst_54 = arith.constant dense<0.000000e+00> : vector<128x128xf32>
    %120 = tpu.matmul %118, %119, %cst_54 {dimension_numbers = #tpu.dot_dimension_numbers<[1], [0], [0], [1], [0, 0, 1, 1], [], []>} : vector<128x1152xbf16>, vector<1152x128xbf16>, vector<128x128xf32> -> vector<128x128xf32>
    %c0_55 = arith.constant 0 : index
    %c0_56 = arith.constant 0 : index
    %121 = vector.load %arg7[%c0_55, %c0_56] : memref<1x128xf32, #tpu.memory_space<vmem>>, vector<1x128xf32>
    %122 = vector.broadcast %121 : vector<1x128xf32> to vector<128x128xf32>
    %123 = arith.addf %120, %122 : vector<128x128xf32>
    %cst_57 = arith.constant 0.000000e+00 : f32
    %124 = vector.broadcast %cst_57 : f32 to vector<128x128xf32>
    %125 = arith.cmpf ogt, %123, %124 : vector<128x128xf32>
    %cst_58 = arith.constant 1.000000e-01 : f32
    %126 = vector.broadcast %cst_58 : f32 to vector<128x128xf32>
    %127 = arith.mulf %126, %123 : vector<128x128xf32>
    %128 = arith.select %125, %123, %127 : vector<128x128xi1>, vector<128x128xf32>
    %129 = arith.extf %1 : vector<128x128xbf16> to vector<128x128xf32>
    %130 = arith.addf %129, %128 : vector<128x128xf32>
    %c0_59 = arith.constant 0 : index
    %c0_60 = arith.constant 0 : index
    %c0_61 = arith.constant 0 : index
    %131 = vector.load %arg8[%c0_59, %c0_60, %c0_61] : memref<1x128x128xf32, #tpu.memory_space<vmem>>, vector<1x128x128xf32>
    %132 = vector.shape_cast %131 : vector<1x128x128xf32> to vector<128x128xf32>
    %133 = vector.shape_cast %130 : vector<128x128xf32> to vector<1x128x128xf32>
    tpu.vector_store %arg8[%c0_59, %c0_60, %c0_61], %133 {strides = array<i32>} : memref<1x128x128xf32, #tpu.memory_space<vmem>>, vector<1x128x128xf32>,
    return
  }
  func.func @transform_0(%arg0: i32, %arg1: i32) -> (i32, i32, i32) {
    %c0_i32 = arith.constant 0 : i32
    %c0_i32_0 = arith.constant 0 : i32
    return %arg0, %arg1, %c0_i32 : i32, i32, i32
  }
  func.func @transform_1(%arg0: i32, %arg1: i32) -> (i32, i32, i32, i32) {
    %c0_i32 = arith.constant 0 : i32
    %c0_i32_0 = arith.constant 0 : i32
    %c0_i32_1 = arith.constant 0 : i32
    return %arg0, %arg1, %c0_i32, %c0_i32_0 : i32, i32, i32, i32
  }
  func.func @transform_2(%arg0: i32, %arg1: i32) -> (i32, i32) {
    %c0_i32 = arith.constant 0 : i32
    %c0_i32_0 = arith.constant 0 : i32
    %c0_i32_1 = arith.constant 0 : i32
    return %c0_i32, %c0_i32_0 : i32, i32
  }
  func.func @transform_3(%arg0: i32, %arg1: i32) -> (i32, i32) {
    %c0_i32 = arith.constant 0 : i32
    %c0_i32_0 = arith.constant 0 : i32
    %c0_i32_1 = arith.constant 0 : i32
    return %c0_i32, %c0_i32_0 : i32, i32
  }
  func.func @transform_4(%arg0: i32, %arg1: i32) -> (i32, i32) {
    %c0_i32 = arith.constant 0 : i32
    %c0_i32_0 = arith.constant 0 : i32
    %c0_i32_1 = arith.constant 0 : i32
    return %c0_i32, %c0_i32_0 : i32, i32
  }
  func.func @transform_5(%arg0: i32, %arg1: i32) -> (i32, i32) {
    %c0_i32 = arith.constant 0 : i32
    %c0_i32_0 = arith.constant 0 : i32
    %c0_i32_1 = arith.constant 0 : i32
    return %c0_i32, %c0_i32_0 : i32, i32
  }
  func.func @transform_6(%arg0: i32, %arg1: i32) -> (i32, i32, i32) {
    %c0_i32 = arith.constant 0 : i32
    %c0_i32_0 = arith.constant 0 : i32
    return %arg0, %arg1, %c0_i32 : i32, i32, i32
  }
}

</mosaic_0001>

<llo_original>
// kernel: tpu_custom_call.1
$region0: #{tpu_custom_call.1}
  #allocation0 [shape = 'u32[]', space=smem, size = 0x4, offset = 0x4, fixed_abs, tag = 'smem constant byte address 0x4 - core index']
  #allocation1 [shape = 'u32[144,128]{1,0:T(1,128)}', space=vmem, size = 0x12000, scoped, tag = 'internal scratch']
  #allocation2 [shape = 'f32[160,128]{1,0:T(8,128)}', space=vmem, size = 0x14000, scoped, tag = 'scratch operand']
  #allocation3 [shape = 'bf16[128,1152]{1,0:T(16,128)(2,1)}', space=vmem, size = 0x48000, scoped, tag = 'scratch operand']
  %s0 = inlined_call_operand.hbm [shape: bf16[2,256,128], index: 0, kind: input, shape index: {}]
  %s1 = inlined_call_operand.hbm [shape: bf16[2,2,32,128], index: 1, kind: input, shape index: {}]
  %s2 = inlined_call_operand.hbm [shape: bf16[128,128], index: 2, kind: input, shape index: {}]
  %s3 = inlined_call_operand.vmem [shape: f32[1,128], index: 3, kind: input, shape index: {}]
  %s4 = inlined_call_operand.hbm [shape: bf16[1152,128], index: 4, kind: input, shape index: {}]
  %s5 = inlined_call_operand.vmem [shape: f32[1,128], index: 5, kind: input, shape index: {}]
  %s6 = inlined_call_operand.hbm [shape: f32[2,256,128], index: 6, kind: output, shape index: {}]
  %s7 = sld [smem:[#allocation0]]
  $region73: #{tpu_custom_call.1} parent=0
    _
  %s9 = ssub.s32 1, %s7
  %s10 = scalar_select 0, %s9, %s7
  $region1: #{tpu_custom_call.1} parent=0
    #allocation4 [shape = 'u8[65536]{0}', space=vmem, size = 0x10000, scoped, tag = 'input window, operand 0']
    #allocation5 [shape = 's32[2]{0}', space=sflag, size = 0x8, scoped, tag = 'scoped memory for tpu_custom_call.1']
    #allocation6 [shape = 's32[2]{0}', space=sflag, size = 0x8, scoped, tag = 'scoped memory for tpu_custom_call.1']
    #allocation7 [shape = 'u8[16384]{0}', space=vmem, size = 0x4000, scoped, tag = 'input window, operand 1']
    #allocation8 [shape = 's32[2]{0}', space=sflag, size = 0x8, scoped, tag = 'scoped memory for tpu_custom_call.1']
    #allocation9 [shape = 'u8[32768]{0}', space=vmem, size = 0x8000, scoped, tag = 'input window, operand 2, single buffered']
    #allocation10 [shape = 'u8[294912]{0}', space=vmem, size = 0x48000, scoped, tag = 'input window, operand 4, single buffered']
    #allocation11 [shape = 's32[1]{0}', space=sflag, size = 0x4, scoped, tag = 'scoped memory for tpu_custom_call.1']
    #allocation12 [shape = 'u8[131072]{0}', space=vmem, size = 0x20000, scoped, tag = 'output window, operand 0']
    %11 = vsyncpa [#allocation5], 0
    %s12 = scalar_lea.sflag [#allocation5], 1
    %13 = vsyncpa %s12, 0
    %14 = vsyncpa [#allocation8], 0
    %s15 = scalar_lea.sflag [#allocation8], 1
    %16 = vsyncpa %s15, 0
    %17 = vsyncpa [#allocation11], 0
    %18 = vsyncpa [#allocation6], 0
    %s19 = scalar_lea.sflag [#allocation6], 1
    %20 = vsyncpa %s19, 0
    loop: start=0, step=1, limit=6
    $region2: #{tpu_custom_call.1} parent=1 // loop_pre_header
      _
    $region3: #{tpu_custom_call.1} parent=1 // loop_header
      %s22 = sphi 0, %s26
      %p23 = scmp.ge.s32.totalorder %s22, 6
      %s29 = sphi 0, %s41
      %s30 = sphi 0, %s37
      %s31 = sphi 0, %s29
      %s32 = sphi 0, %s30
      %s33 = sphi 0, %s31
      %s34 = sphi 0, %s32
      %s46 = sphi 0, %s48
      %s49 = sphi 0, %s46
      %s50 = sphi 0, %s49
      %s66 = sphi 0, %s50
      %s74 = sphi 0, %s76
      %s77 = sphi 0, %s74
      %s78 = sphi 0, %s77
      %s94 = sphi 0, %s78
      %s98 = sphi 0, %s98
      %s100 = sphi 0, %s98
      %s101 = sphi 0, %s100
      %s115 = sphi 0, %s101
      %s119 = sphi 0, %s119
      %s121 = sphi 0, %s119
      %s122 = sphi 0, %s121
      %s136 = sphi 0, %s122
      %s140 = sphi 0, %s140
      %s142 = sphi 0, %s140
      %s143 = sphi 0, %s142
      %s157 = sphi 0, %s143
      %s161 = sphi 0, %s161
      %s163 = sphi 0, %s161
      %s164 = sphi 0, %s163
      %s178 = sphi 0, %s164
      %s186 = sphi 0, %s188
      %s189 = sphi 0, %s186
      %s190 = sphi 0, %s189
      %s206 = sphi 0, %s190
    $region4: #{tpu_custom_call.1} parent=1 // loop_header_branch
      %25 = sbr.rel (%p23) target = $region8
    $region5: #{tpu_custom_call.1} parent=1 // loop_body
      %s27 = ssub.s32 %s22, 1
      %s28 = ssub.s32 %s22, 2
      %s35 = sadd.s32 1, %s30
      %p36 = scmp.ge.s32.totalorder %s35, 2
      %s37 = scalar_select %p36, 0, %s35
      %s38 = sadd.s32 1, %s29
      %s39 = scalar_select %p36, %s38, %s29
      %p40 = scmp.ge.s32.totalorder %s39, 2
      %s41 = scalar_select %p40, 0, %s39
      %s42 = ssub.s32 %s29, %s41
      %s43 = ssub.s32 %s30, %s37
      %s44 = sor.u32 %s42, %s43
      %p45 = scmp.eq.s32.totalorder %s44, 0
      %s47 = sadd.s32 %s46, 1
      %s48 = scalar_select %p45, %s46, %s47
      %p51 = pneg %p45
      %p52 = scmp.eq.s32.totalorder %s22, 3
      %p53 = por %p51, %p52
      %p54 = scmp.ne.s32.totalorder %s46, %s49
      %p55 = scmp.eq.s32.totalorder %s22, 0
      %p56 = por %p54, %p55
      %p57 = scmp.ne.s32.totalorder %s46, %s49
      %p58 = scmp.eq.s32.totalorder %s27, 3
      %p59 = por %p57, %p58
      %p60 = scmp.ne.s32.totalorder %s49, %s50
      %p61 = scmp.eq.s32.totalorder %s27, 0
      %p62 = por %p60, %p61
      %p63 = scmp.ne.s32.totalorder %s49, %s50
      %p64 = scmp.eq.s32.totalorder %s28, 3
      %p65 = por %p63, %p64
      %p67 = scmp.ne.s32.totalorder %s50, %s66
      %p68 = scmp.eq.s32.totalorder %s28, 0
      %p69 = por %p67, %p68
      %s70 = ssub.s32 %s29, %s41
      %s71 = ssub.s32 %s30, %s37
      %s72 = sor.u32 %s70, %s71
      %p73 = scmp.eq.s32.totalorder %s72, 0
      %s75 = sadd.s32 %s74, 1
      %s76 = scalar_select %p73, %s74, %s75
      %p79 = pneg %p73
      %p80 = scmp.eq.s32.totalorder %s22, 3
      %p81 = por %p79, %p80
      %p82 = scmp.ne.s32.totalorder %s74, %s77
      %p83 = scmp.eq.s32.totalorder %s22, 0
      %p84 = por %p82, %p83
      %p85 = scmp.ne.s32.totalorder %s74, %s77
      %p86 = scmp.eq.s32.totalorder %s27, 3
      %p87 = por %p85, %p86
      %p88 = scmp.ne.s32.totalorder %s77, %s78
      %p89 = scmp.eq.s32.totalorder %s27, 0
      %p90 = por %p88, %p89
      %p91 = scmp.ne.s32.totalorder %s77, %s78
      %p92 = scmp.eq.s32.totalorder %s28, 3
      %p93 = por %p91, %p92
      %p95 = scmp.ne.s32.totalorder %s78, %s94
      %p96 = scmp.eq.s32.totalorder %s28, 0
      %p97 = por %p95, %p96
      %s99 = sadd.s32 %s98, 1
      %p102 = scmp.eq.s32.totalorder %s22, 3
      %p103 = scmp.ne.s32.totalorder %s98, %s100
      %p104 = scmp.eq.s32.totalorder %s22, 0
      %p105 = por %p103, %p104
      %p106 = scmp.ne.s32.totalorder %s98, %s100
      %p107 = scmp.eq.s32.totalorder %s27, 3
      %p108 = por %p106, %p107
      %p109 = scmp.ne.s32.totalorder %s100, %s101
      %p110 = scmp.eq.s32.totalorder %s27, 0
      %p111 = por %p109, %p110
      %p112 = scmp.ne.s32.totalorder %s100, %s101
      %p113 = scmp.eq.s32.totalorder %s28, 3
      %p114 = por %p112, %p113
      %p116 = scmp.ne.s32.totalorder %s101, %s115
      %p117 = scmp.eq.s32.totalorder %s28, 0
      %p118 = por %p116, %p117
      %s120 = sadd.s32 %s119, 1
      %p123 = scmp.eq.s32.totalorder %s22, 3
      %p124 = scmp.ne.s32.totalorder %s119, %s121
      %p125 = scmp.eq.s32.totalorder %s22, 0
      %p126 = por %p124, %p125
      %p127 = scmp.ne.s32.totalorder %s119, %s121
      %p128 = scmp.eq.s32.totalorder %s27, 3
      %p129 = por %p127, %p128
      %p130 = scmp.ne.s32.totalorder %s121, %s122
      %p131 = scmp.eq.s32.totalorder %s27, 0
      %p132 = por %p130, %p131
      %p133 = scmp.ne.s32.totalorder %s121, %s122
      %p134 = scmp.eq.s32.totalorder %s28, 3
      %p135 = por %p133, %p134
      %p137 = scmp.ne.s32.totalorder %s122, %s136
      %p138 = scmp.eq.s32.totalorder %s28, 0
      %p139 = por %p137, %p138
      %s141 = sadd.s32 %s140, 1
      %p144 = scmp.eq.s32.totalorder %s22, 3
      %p145 = scmp.ne.s32.totalorder %s140, %s142
      %p146 = scmp.eq.s32.totalorder %s22, 0
      %p147 = por %p145, %p146
      %p148 = scmp.ne.s32.totalorder %s140, %s142
      %p149 = scmp.eq.s32.totalorder %s27, 3
      %p150 = por %p148, %p149
      %p151 = scmp.ne.s32.totalorder %s142, %s143
      %p152 = scmp.eq.s32.totalorder %s27, 0
      %p153 = por %p151, %p152
      %p154 = scmp.ne.s32.totalorder %s142, %s143
      %p155 = scmp.eq.s32.totalorder %s28, 3
      %p156 = por %p154, %p155
      %p158 = scmp.ne.s32.totalorder %s143, %s157
      %p159 = scmp.eq.s32.totalorder %s28, 0
      %p160 = por %p158, %p159
      %s162 = sadd.s32 %s161, 1
      %p165 = scmp.eq.s32.totalorder %s22, 3
      %p166 = scmp.ne.s32.totalorder %s161, %s163
      %p167 = scmp.eq.s32.totalorder %s22, 0
      %p168 = por %p166, %p167
      %p169 = scmp.ne.s32.totalorder %s161, %s163
      %p170 = scmp.eq.s32.totalorder %s27, 3
      %p171 = por %p169, %p170
      %p172 = scmp.ne.s32.totalorder %s163, %s164
      %p173 = scmp.eq.s32.totalorder %s27, 0
      %p174 = por %p172, %p173
      %p175 = scmp.ne.s32.totalorder %s163, %s164
      %p176 = scmp.eq.s32.totalorder %s28, 3
      %p177 = por %p175, %p176
      %p179 = scmp.ne.s32.totalorder %s164, %s178
      %p180 = scmp.eq.s32.totalorder %s28, 0
      %p181 = por %p179, %p180
      %s182 = ssub.s32 %s29, %s41
      %s183 = ssub.s32 %s30, %s37
      %s184 = sor.u32 %s182, %s183
      %p185 = scmp.eq.s32.totalorder %s184, 0
      %s187 = sadd.s32 %s186, 1
      %s188 = scalar_select %p185, %s186, %s187
      %p191 = pneg %p185
      %p192 = scmp.eq.s32.totalorder %s22, 3
      %p193 = por %p191, %p192
      %p194 = scmp.ne.s32.totalorder %s186, %s189
      %p195 = scmp.eq.s32.totalorder %s22, 0
      %p196 = por %p194, %p195
      %p197 = scmp.ne.s32.totalorder %s186, %s189
      %p198 = scmp.eq.s32.totalorder %s27, 3
      %p199 = por %p197, %p198
      %p200 = scmp.ne.s32.totalorder %s189, %s190
      %p201 = scmp.eq.s32.totalorder %s27, 0
      %p202 = por %p200, %p201
      %p203 = scmp.ne.s32.totalorder %s189, %s190
      %p204 = scmp.eq.s32.totalorder %s28, 3
      %p205 = por %p203, %p204
      %p207 = scmp.ne.s32.totalorder %s190, %s206
      %p208 = scmp.eq.s32.totalorder %s28, 0
      %p209 = por %p207, %p208
      %p210 = scmp.le.s32.totalorder 1, %s22
      %p211 = scmp.lt.s32.totalorder %s22, 5
      %p212 = pnand %p210, %p211
      %p213 = pneg %p212
      // Predicated region
      $region9: #{tpu_custom_call.1} parent=5 // pred_check
        _
      $region10: #{tpu_custom_call.1} parent=5 // pred_check_branch
        %215 = sbr.rel (%p212) target = $region12
      $region11: #{tpu_custom_call.1} parent=5 // pred_region
        %s216 = ssub.s32 %s22, 1
        // Predicated region
        $region13: #{tpu_custom_call.1} parent=11 // pred_check
          %p217 = pneg %p111
        $region14: #{tpu_custom_call.1} parent=11 // pred_check_branch
          %219 = sbr.rel (%p217) target = $region16
        $region15: #{tpu_custom_call.1} parent=11 // pred_region
          %s221 = ssub.s32 1024, 1024
          %222 = vsyncadd [#allocation8], %s221
          %s223 = sshll.u32 [#allocation9], 4
          %s224 = int_to_ptr.vmem [resolvable:$true] %s223
          %229 = dma.hbm_to_vmem [thread:$0]  %s2, 1024, %s224, [#allocation8], 64, 64, 4
        $region16: #{tpu_custom_call.1} parent=11 // pred_fallthru
          _
        // Predicated region
        $region17: #{tpu_custom_call.1} parent=11 // pred_check
          %p230 = pneg %p132
        $region18: #{tpu_custom_call.1} parent=11 // pred_check_branch
          %232 = sbr.rel (%p230) target = $region20
        $region19: #{tpu_custom_call.1} parent=11 // pred_region
          _
        $region20: #{tpu_custom_call.1} parent=11 // pred_fallthru
          _
        // Predicated region
        $region21: #{tpu_custom_call.1} parent=11 // pred_check
          %p233 = pneg %p153
        $region22: #{tpu_custom_call.1} parent=11 // pred_check_branch
          %235 = sbr.rel (%p233) target = $region24
        $region23: #{tpu_custom_call.1} parent=11 // pred_region
          %s237 = ssub.s32 9216, 9216
          %238 = vsyncadd [#allocation11], %s237
          %s239 = sshll.u32 [#allocation10], 4
          %s240 = int_to_ptr.vmem [resolvable:$true] %s239
          %245 = dma.hbm_to_vmem [thread:$0]  %s4, 9216, %s240, [#allocation11], 64, 64, 4
        $region24: #{tpu_custom_call.1} parent=11 // pred_fallthru
          _
        // Predicated region
        $region25: #{tpu_custom_call.1} parent=11 // pred_check
          %p246 = pneg %p174
        $region26: #{tpu_custom_call.1} parent=11 // pred_check_branch
          %248 = sbr.rel (%p246) target = $region28
        $region27: #{tpu_custom_call.1} parent=11 // pred_region
          _
        $region28: #{tpu_custom_call.1} parent=11 // pred_fallthru
          _
      $region12: #{tpu_custom_call.1} parent=5 // pred_fallthru
        _
      %p249 = scmp.lt.s32.totalorder %s22, 4
      // Predicated region
      $region29: #{tpu_custom_call.1} parent=5 // pred_check
        %p250 = pneg %p249
      $region30: #{tpu_custom_call.1} parent=5 // pred_check_branch
        %252 = sbr.rel (%p250) target = $region32
      $region31: #{tpu_custom_call.1} parent=5 // pred_region
        // Predicated region
        $region33: #{tpu_custom_call.1} parent=31 // pred_check
          %p253 = pneg %p56
        $region34: #{tpu_custom_call.1} parent=31 // pred_check_branch
          %255 = sbr.rel (%p253) target = $region36
        $region35: #{tpu_custom_call.1} parent=31 // pred_region
          %s256 = sand.u32 %s46, 1
          %s257 = scalar_lea.sflag [#allocation5], %s256
          %s258 = sand.u32 %s46, 1
          %s259 = smul.addr %s258, 64
          %s260 = scalar_lea.vmem [#allocation4], %s259
          %s261 = smul.u32 16, %s30
          %s263 = ssub.s32 1024, 1024
          %264 = vsyncadd %s257, %s263
          %s265 = smul.addr %s29, 32
          %s266 = sadd.s32 %s261, %s265
          %s267 = smul.addr %s266, 64
          %s268 = scalar_lea.hbm %s0, %s267
          %s269 = sshll.u32 %s260, 4
          %s270 = int_to_ptr.vmem [resolvable:$true] %s269
          %275 = dma.hbm_to_vmem [thread:$0]  %s268, 1024, %s270, %s257, 64, 64, 4
        $region36: #{tpu_custom_call.1} parent=31 // pred_fallthru
          _
        // Predicated region
        $region37: #{tpu_custom_call.1} parent=31 // pred_check
          %p276 = pneg %p84
        $region38: #{tpu_custom_call.1} parent=31 // pred_check_branch
          %278 = sbr.rel (%p276) target = $region40
        $region39: #{tpu_custom_call.1} parent=31 // pred_region
          %s279 = sand.u32 %s22, 1
          %s280 = scalar_lea.sflag [#allocation8], %s279
          %s281 = sand.u32 %s74, 1
          %s282 = smul.addr %s281, 16
          %s283 = scalar_lea.vmem [#allocation7], %s282
          %s285 = ssub.s32 256, 256
          %286 = vsyncadd %s280, %s285
          %s287 = smul.addr %s30, 4
          %s288 = smul.addr %s29, 8
          %s289 = sadd.s32 %s287, %s288
          %s290 = smul.addr %s289, 64
          %s291 = scalar_lea.hbm %s1, %s290
          %s292 = sshll.u32 %s283, 4
          %s293 = int_to_ptr.vmem [resolvable:$true] %s292
          %298 = dma.hbm_to_vmem [thread:$0]  %s291, 256, %s293, %s280, 64, 64, 4
        $region40: #{tpu_custom_call.1} parent=31 // pred_fallthru
          _
      $region32: #{tpu_custom_call.1} parent=5 // pred_fallthru
        _
      %p299 = scmp.le.s32.totalorder 1, %s22
      %p300 = scmp.lt.s32.totalorder %s22, 5
      %p301 = pnand %p299, %p300
      %p302 = pneg %p301
      // Predicated region
      $region41: #{tpu_custom_call.1} parent=5 // pred_check
        _
      $region42: #{tpu_custom_call.1} parent=5 // pred_check_branch
        %304 = sbr.rel (%p301) target = $region44
      $region43: #{tpu_custom_call.1} parent=5 // pred_region
        %s305 = ssub.s32 %s22, 1
        %s306 = sand.u32 %s49, 1
        %s307 = scalar_lea.sflag [#allocation5], %s306
        %s308 = sand.u32 %s49, 1
        %s309 = smul.addr %s308, 64
        %s310 = scalar_lea.vmem [#allocation4], %s309
        // Predicated region
        $region45: #{tpu_custom_call.1} parent=43 // pred_check
          %p311 = pneg %p62
        $region46: #{tpu_custom_call.1} parent=43 // pred_check_branch
          %313 = sbr.rel (%p311) target = $region48
        $region47: #{tpu_custom_call.1} parent=43 // pred_region
          %314 = dma.done %s307, 1024
        $region48: #{tpu_custom_call.1} parent=43 // pred_fallthru
          _
        %s315 = sand.u32 %s27, 1
        %s316 = scalar_lea.sflag [#allocation8], %s315
        %s317 = sand.u32 %s77, 1
        %s318 = smul.addr %s317, 16
        %s319 = scalar_lea.vmem [#allocation7], %s318
        // Predicated region
        $region49: #{tpu_custom_call.1} parent=43 // pred_check
          %p320 = pneg %p90
        $region50: #{tpu_custom_call.1} parent=43 // pred_check_branch
          %322 = sbr.rel (%p320) target = $region52
        $region51: #{tpu_custom_call.1} parent=43 // pred_region
          %323 = dma.done %s316, 256
        $region52: #{tpu_custom_call.1} parent=43 // pred_fallthru
          _
        // Predicated region
        $region53: #{tpu_custom_call.1} parent=43 // pred_check
          %p324 = pneg %p111
        $region54: #{tpu_custom_call.1} parent=43 // pred_check_branch
          %326 = sbr.rel (%p324) target = $region56
        $region55: #{tpu_custom_call.1} parent=43 // pred_region
          %327 = dma.done [#allocation8], 1024
        $region56: #{tpu_custom_call.1} parent=43 // pred_fallthru
          _
        // Predicated region
        $region57: #{tpu_custom_call.1} parent=43 // pred_check
          %p328 = pneg %p153
        $region58: #{tpu_custom_call.1} parent=43 // pred_check_branch
          %330 = sbr.rel (%p328) target = $region60
        $region59: #{tpu_custom_call.1} parent=43 // pred_region
          %331 = dma.done [#allocation11], 9216
        $region60: #{tpu_custom_call.1} parent=43 // pred_fallthru
          _
        %s332 = sand.u32 %s49, 1
        %s333 = scalar_lea.sflag [#allocation5], %s332
        %s334 = sand.u32 %s49, 1
        %s335 = smul.addr %s334, 64
        %s336 = scalar_lea.vmem [#allocation4], %s335
        %p337 = pneg %p62
        %p338 = pneg %p59
        %s339 = sand.u32 %s27, 1
        %s340 = scalar_lea.sflag [#allocation8], %s339
        %s341 = sand.u32 %s77, 1
        %s342 = smul.addr %s341, 16
        %s343 = scalar_lea.vmem [#allocation7], %s342
        %p344 = pneg %p90
        %p345 = pneg %p87
        %p346 = pneg %p111
        %p347 = pneg %p108
        %p348 = pneg %p132
        %p349 = pneg %p129
        %p350 = pneg %p153
        %p351 = pneg %p150
        %p352 = pneg %p174
        %p353 = pneg %p171
        %p354 = pneg %p202
        %p355 = pneg %p199
        %s356 = sand.u32 %s189, 1
        %s357 = scalar_lea.sflag [#allocation6], %s356
        %s358 = sand.u32 %s189, 1
        %s359 = smul.addr %s358, 128
        %s360 = scalar_lea.vmem [#allocation12], %s359
        %s361 = smul.u32 16, %s32
        %s362 = smul.u32 16, %s32
        %v364 = vld [vmem:[%s310] sm:$0xf]
        %v365 = vld [vmem:[%s310 + $0x4] sm:$0xf]
        %v366 = vld [vmem:[%s310 + $0x8] sm:$0xf]
        %v367 = vld [vmem:[%s310 + $0xc] sm:$0xf]
        %v368 = vld [vmem:[%s310 + $0x10] sm:$0xf]
        %v369 = vld [vmem:[%s310 + $0x14] sm:$0xf]
        %v370 = vld [vmem:[%s310 + $0x18] sm:$0xf]
        %v371 = vld [vmem:[%s310 + $0x1c] sm:$0xf]
        %v372 = vld [vmem:[%s310 + $0x20] sm:$0xf]
        %v373 = vld [vmem:[%s310 + $0x24] sm:$0xf]
        %v374 = vld [vmem:[%s310 + $0x28] sm:$0xf]
        %v375 = vld [vmem:[%s310 + $0x2c] sm:$0xf]
        %v376 = vld [vmem:[%s310 + $0x30] sm:$0xf]
        %v377 = vld [vmem:[%s310 + $0x34] sm:$0xf]
        %v378 = vld [vmem:[%s310 + $0x38] sm:$0xf]
        %v379 = vld [vmem:[%s310 + $0x3c] sm:$0xf]
        %v380 = vld [vmem:[%s319] sm:$0xf]
        %v381 = vld [vmem:[%s319 + $0x4] sm:$0xf]
        %v382 = vld [vmem:[%s319 + $0x8] sm:$0xf]
        %v383 = vld [vmem:[%s319 + $0xc] sm:$0xf]
        %v384 = vld [vmem:[#allocation9] sm:$0xf]
        %v385 = vld [vmem:[#allocation9 + $0x4] sm:$0xf]
        %v386 = vld [vmem:[#allocation9 + $0x8] sm:$0xf]
        %v387 = vld [vmem:[#allocation9 + $0xc] sm:$0xf]
        %v388 = vld [vmem:[#allocation9 + $0x10] sm:$0xf]
        %v389 = vld [vmem:[#allocation9 + $0x14] sm:$0xf]
        %v390 = vld [vmem:[#allocation9 + $0x18] sm:$0xf]
        %v391 = vld [vmem:[#allocation9 + $0x1c] sm:$0xf]
        %v392 = vld [vmem:[#allocation9 + $0x20] sm:$0xf]
        %v393 = vld [vmem:[#allocation9 + $0x24] sm:$0xf]
        %v394 = vld [vmem:[#allocation9 + $0x28] sm:$0xf]
        %v395 = vld [vmem:[#allocation9 + $0x2c] sm:$0xf]
        %v396 = vld [vmem:[#allocation9 + $0x30] sm:$0xf]
        %v397 = vld [vmem:[#allocation9 + $0x34] sm:$0xf]
        %v398 = vld [vmem:[#allocation9 + $0x38] sm:$0xf]
        %v399 = vld [vmem:[#allocation9 + $0x3c] sm:$0xf]
        %v400 = vld [vmem:[%s3] sm:$0x1]
        %v402 = vlaneseq
        %v403 = vshrl.u32 %v402, 7
        %v404 = vsub.s32 0, %v403
        %v405 = vrot.slane %v400, %v404
        %v411 = vunpack.c.l.b16 %v380
        %v412 = vunpack.c.l.b16 %v381
        %v413 = vunpack.c.l.b16 %v382
        %v414 = vunpack.c.l.b16 %v383
        %v415 = vpack.c.b16 %v412, %v411
        %v416 = vpack.c.b16 %v414, %v413
        %v435 = vunpack.c.l.b16 %v384
        %v436 = vunpack.c.l.b16 %v385
        %v437 = vunpack.c.l.b16 %v386
        %v438 = vunpack.c.l.b16 %v387
        %v439 = vunpack.c.l.b16 %v388
        %v440 = vunpack.c.l.b16 %v389
        %v441 = vunpack.c.l.b16 %v390
        %v442 = vunpack.c.l.b16 %v391
        %v443 = vunpack.c.l.b16 %v392
        %v444 = vunpack.c.l.b16 %v393
        %v445 = vunpack.c.l.b16 %v394
        %v446 = vunpack.c.l.b16 %v395
        %v447 = vunpack.c.l.b16 %v396
        %v448 = vunpack.c.l.b16 %v397
        %v449 = vunpack.c.l.b16 %v398
        %v450 = vunpack.c.l.b16 %v399
        %v451 = vpack.c.b16 %v436, %v435
        %v452 = vpack.c.b16 %v438, %v437
        %v453 = vpack.c.b16 %v440, %v439
        %v454 = vpack.c.b16 %v442, %v441
        %v455 = vpack.c.b16 %v444, %v443
        %v456 = vpack.c.b16 %v446, %v445
        %v457 = vpack.c.b16 %v448, %v447
        %v458 = vpack.c.b16 %v450, %v449
        %467 = vmatprep.subr.bf16.mxu0 0
        %468 = vmatpush1.bf16.msra.mxu0 %v451
        %469 = vmatprep.subr.bf16.mxu0 0
        %470 = vmatpush1.bf16.msra.mxu0 %v452
        %471 = vmatprep.subr.bf16.mxu0 0
        %472 = vmatpush1.bf16.msra.mxu0 %v453
        %473 = vmatprep.subr.bf16.mxu0 0
        %474 = vmatpush1.bf16.msra.mxu0 %v454
        %475 = vmatprep.subr.bf16.mxu0 0
        %476 = vmatpush1.bf16.msra.mxu0 %v455
        %477 = vmatprep.subr.bf16.mxu0 0
        %478 = vmatpush1.bf16.msra.mxu0 %v456
        %479 = vmatprep.subr.bf16.mxu0 0
        %480 = vmatpush1.bf16.msra.mxu0 %v457
        %481 = vmatprep.subr.bf16.mxu0 0
        %482 = vmatpush1.bf16.msra.mxu0 %v458
        %483 = vmatprep.subr.bf16.mxu0 0
        %484 = vmatpush1.bf16.msra.mxu0 0
        %485 = vmatprep.subr.bf16.mxu0 0
        %486 = vmatpush1.bf16.msra.mxu0 0
        %487 = vmatprep.subr.bf16.mxu0 0
        %488 = vmatpush1.bf16.msra.mxu0 0
        %489 = vmatprep.subr.bf16.mxu0 0
        %490 = vmatpush1.bf16.msra.mxu0 0
        %491 = vmatprep.subr.bf16.mxu0 0
        %492 = vmatpush1.bf16.msra.mxu0 0
        %493 = vmatprep.subr.bf16.mxu0 0
        %494 = vmatpush1.bf16.msra.mxu0 0
        %495 = vmatprep.subr.bf16.mxu0 0
        %496 = vmatpush1.bf16.msra.mxu0 0
        %497 = vmatprep.subr.bf16.mxu0 0
        %498 = vmatpush1.bf16.msra.mxu0 0
        %499 = vmatprep.mubr.bf16.mxu0 0
        %500 = vmatmul.mubr.bf16.gmra.mrb[0].mxu0 %v415
        %v501 = vpop.f32.mrb[0].mxu0
        %v502 = vadd.f32 %v405, %v501
        %v503 = vpop.f32.mrb[0].mxu0
        %v504 = vpop.f32.mrb[0].mxu0
        %v505 = vadd.f32 %v405, %v504
        %v506 = vpop.f32.mrb[0].mxu0
        %507 = vmatprep.mubr.bf16.mxu0 0
        %508 = vmatmul.mubr.bf16.gmra.mrb[0].mxu0 %v416
        %v509 = vpop.f32.mrb[0].mxu0
        %v510 = vadd.f32 %v405, %v509
        %v511 = vpop.f32.mrb[0].mxu0
        %v512 = vpop.f32.mrb[0].mxu0
        %v513 = vadd.f32 %v405, %v512
        %v514 = vpop.f32.mrb[0].mxu0
        %515 = vdwg.mxu0
        %vm516 = vcmp.gt.f32.partialorder %v502, 0.0
        %vm517 = vcmp.gt.f32.partialorder %v505, 0.0
        %vm518 = vcmp.gt.f32.partialorder %v510, 0.0
        %vm519 = vcmp.gt.f32.partialorder %v513, 0.0
        %v520 = vmul.f32 %v502, 0.1
        %v521 = vmul.f32 %v505, 0.1
        %v522 = vmul.f32 %v510, 0.1
        %v523 = vmul.f32 %v513, 0.1
        %v524 = vsel %vm516, %v502, %v520
        %v525 = vsel %vm517, %v505, %v521
        %v526 = vsel %vm518, %v510, %v522
        %v527 = vsel %vm519, %v513, %v523
        %528 = vst [vmem:[#allocation2] sm:$0xff] %v524
        %529 = vst [vmem:[#allocation2 + $0x8] sm:$0xff] %v525
        %530 = vst [vmem:[#allocation2 + $0x90] sm:$0xff] %v526
        %531 = vst [vmem:[#allocation2 + $0x98] sm:$0xff] %v527
        %v532 = vld [vmem:[#allocation9] sm:$0xf]
        %v533 = vld [vmem:[#allocation9 + $0x4] sm:$0xf]
        %v534 = vld [vmem:[#allocation9 + $0x8] sm:$0xf]
        %v535 = vld [vmem:[#allocation9 + $0xc] sm:$0xf]
        %v536 = vld [vmem:[#allocation9 + $0x10] sm:$0xf]
        %v537 = vld [vmem:[#allocation9 + $0x14] sm:$0xf]
        %v538 = vld [vmem:[#allocation9 + $0x18] sm:$0xf]
        %v539 = vld [vmem:[#allocation9 + $0x1c] sm:$0xf]
        %v540 = vld [vmem:[#allocation9 + $0x20] sm:$0xf]
        %v541 = vld [vmem:[#allocation9 + $0x24] sm:$0xf]
        %v542 = vld [vmem:[#allocation9 + $0x28] sm:$0xf]
        %v543 = vld [vmem:[#allocation9 + $0x2c] sm:$0xf]
        %v544 = vld [vmem:[#allocation9 + $0x30] sm:$0xf]
        %v545 = vld [vmem:[#allocation9 + $0x34] sm:$0xf]
        %v546 = vld [vmem:[#allocation9 + $0x38] sm:$0xf]
        %v547 = vld [vmem:[#allocation9 + $0x3c] sm:$0xf]
        %v548 = vld [vmem:[%s3] sm:$0x1]
        %v550 = vlaneseq
        %v551 = vshrl.u32 %v550, 7
        %v552 = vsub.s32 0, %v551
        %v553 = vrot.slane %v548, %v552
        %v571 = vunpack.c.l.b16 %v364
        %v572 = vunpack.c.l.b16 %v365
        %v573 = vunpack.c.l.b16 %v366
        %v574 = vunpack.c.l.b16 %v367
        %v575 = vunpack.c.l.b16 %v368
        %v576 = vunpack.c.l.b16 %v369
        %v577 = vunpack.c.l.b16 %v370
        %v578 = vunpack.c.l.b16 %v371
        %v579 = vunpack.c.l.b16 %v372
        %v580 = vunpack.c.l.b16 %v373
        %v581 = vunpack.c.l.b16 %v374
        %v582 = vunpack.c.l.b16 %v375
        %v583 = vunpack.c.l.b16 %v376
        %v584 = vunpack.c.l.b16 %v377
        %v585 = vunpack.c.l.b16 %v378
        %v586 = vunpack.c.l.b16 %v379
        %v587 = vpack.c.b16 %v572, %v571
        %v588 = vpack.c.b16 %v574, %v573
        %v589 = vpack.c.b16 %v576, %v575
        %v590 = vpack.c.b16 %v578, %v577
        %v591 = vpack.c.b16 %v580, %v579
        %v592 = vpack.c.b16 %v582, %v581
        %v593 = vpack.c.b16 %v584, %v583
        %v594 = vpack.c.b16 %v586, %v585
        %v619 = vunpack.c.l.b16 %v532
        %v620 = vunpack.c.l.b16 %v533
        %v621 = vunpack.c.l.b16 %v534
        %v622 = vunpack.c.l.b16 %v535
        %v623 = vunpack.c.l.b16 %v536
        %v624 = vunpack.c.l.b16 %v537
        %v625 = vunpack.c.l.b16 %v538
        %v626 = vunpack.c.l.b16 %v539
        %v627 = vunpack.c.l.b16 %v540
        %v628 = vunpack.c.l.b16 %v541
        %v629 = vunpack.c.l.b16 %v542
        %v630 = vunpack.c.l.b16 %v543
        %v631 = vunpack.c.l.b16 %v544
        %v632 = vunpack.c.l.b16 %v545
        %v633 = vunpack.c.l.b16 %v546
        %v634 = vunpack.c.l.b16 %v547
        %v635 = vpack.c.b16 %v620, %v619
        %v636 = vpack.c.b16 %v622, %v621
        %v637 = vpack.c.b16 %v624, %v623
        %v638 = vpack.c.b16 %v626, %v625
        %v639 = vpack.c.b16 %v628, %v627
        %v640 = vpack.c.b16 %v630, %v629
        %v641 = vpack.c.b16 %v632, %v631
        %v642 = vpack.c.b16 %v634, %v633
        %651 = vmatprep.subr.bf16.mxu0 0
        %652 = vmatpush1.bf16.msra.mxu0 %v635
        %653 = vmatprep.subr.bf16.mxu0 0
        %654 = vmatpush1.bf16.msra.mxu0 %v636
        %655 = vmatprep.subr.bf16.mxu0 0
        %656 = vmatpush1.bf16.msra.mxu0 %v637
        %657 = vmatprep.subr.bf16.mxu0 0
        %658 = vmatpush1.bf16.msra.mxu0 %v638
        %659 = vmatprep.subr.bf16.mxu0 0
        %660 = vmatpush1.bf16.msra.mxu0 %v639
        %661 = vmatprep.subr.bf16.mxu0 0
        %662 = vmatpush1.bf16.msra.mxu0 %v640
        %663 = vmatprep.subr.bf16.mxu0 0
        %664 = vmatpush1.bf16.msra.mxu0 %v641
        %665 = vmatprep.subr.bf16.mxu0 0
        %666 = vmatpush1.bf16.msra.mxu0 %v642
        %667 = vmatprep.subr.bf16.mxu0 0
        %668 = vmatpush1.bf16.msra.mxu0 0
        %669 = vmatprep.subr.bf16.mxu0 0
        %670 = vmatpush1.bf16.msra.mxu0 0
        %671 = vmatprep.subr.bf16.mxu0 0
        %672 = vmatpush1.bf16.msra.mxu0 0
        %673 = vmatprep.subr.bf16.mxu0 0
        %674 = vmatpush1.bf16.msra.mxu0 0
        %675 = vmatprep.subr.bf16.mxu0 0
        %676 = vmatpush1.bf16.msra.mxu0 0
        %677 = vmatprep.subr.bf16.mxu0 0
        %678 = vmatpush1.bf16.msra.mxu0 0
        %679 = vmatprep.subr.bf16.mxu0 0
        %680 = vmatpush1.bf16.msra.mxu0 0
        %681 = vmatprep.subr.bf16.mxu0 0
        %682 = vmatpush1.bf16.msra.mxu0 0
        %683 = vmatprep.mubr.bf16.mxu0 0
        %684 = vmatmul.mubr.bf16.gmra.mrb[0].mxu0 %v587
        %v685 = vpop.f32.mrb[0].mxu0
        %v686 = vadd.f32 %v553, %v685
        %v687 = vpop.f32.mrb[0].mxu0
        %v688 = vpop.f32.mrb[0].mxu0
        %v689 = vadd.f32 %v553, %v688
        %v690 = vpop.f32.mrb[0].mxu0
        %691 = vmatprep.mubr.bf16.mxu0 0
        %692 = vmatmul.mubr.bf16.gmra.mrb[0].mxu0 %v588
        %v693 = vpop.f32.mrb[0].mxu0
        %v694 = vadd.f32 %v553, %v693
        %v695 = vpop.f32.mrb[0].mxu0
        %v696 = vpop.f32.mrb[0].mxu0
        %v697 = vadd.f32 %v553, %v696
        %v698 = vpop.f32.mrb[0].mxu0
        %699 = vmatprep.mubr.bf16.mxu0 0
        %700 = vmatmul.mubr.bf16.gmra.mrb[0].mxu0 %v589
        %v701 = vpop.f32.mrb[0].mxu0
        %v702 = vadd.f32 %v553, %v701
        %v703 = vpop.f32.mrb[0].mxu0
        %v704 = vpop.f32.mrb[0].mxu0
        %v705 = vadd.f32 %v553, %v704
        %v706 = vpop.f32.mrb[0].mxu0
        %707 = vmatprep.mubr.bf16.mxu0 0
        %708 = vmatmul.mubr.bf16.gmra.mrb[0].mxu0 %v590
        %v709 = vpop.f32.mrb[0].mxu0
        %v710 = vadd.f32 %v553, %v709
        %v711 = vpop.f32.mrb[0].mxu0
        %v712 = vpop.f32.mrb[0].mxu0
        %v713 = vadd.f32 %v553, %v712
        %v714 = vpop.f32.mrb[0].mxu0
        %715 = vmatprep.mubr.bf16.mxu0 0
        %716 = vmatmul.mubr.bf16.gmra.mrb[0].mxu0 %v591
        %v717 = vpop.f32.mrb[0].mxu0
        %v718 = vadd.f32 %v553, %v717
        %v719 = vpop.f32.mrb[0].mxu0
        %v720 = vpop.f32.mrb[0].mxu0
        %v721 = vadd.f32 %v553, %v720
        %v722 = vpop.f32.mrb[0].mxu0
        %723 = vmatprep.mubr.bf16.mxu0 0
        %724 = vmatmul.mubr.bf16.gmra.mrb[0].mxu0 %v592
        %v725 = vpop.f32.mrb[0].mxu0
        %v726 = vadd.f32 %v553, %v725
        %v727 = vpop.f32.mrb[0].mxu0
        %v728 = vpop.f32.mrb[0].mxu0
        %v729 = vadd.f32 %v553, %v728
        %v730 = vpop.f32.mrb[0].mxu0
        %731 = vmatprep.mubr.bf16.mxu0 0
        %732 = vmatmul.mubr.bf16.gmra.mrb[0].mxu0 %v593
        %v733 = vpop.f32.mrb[0].mxu0
        %v734 = vadd.f32 %v553, %v733
        %v735 = vpop.f32.mrb[0].mxu0
        %v736 = vpop.f32.mrb[0].mxu0
        %v737 = vadd.f32 %v553, %v736
        %v738 = vpop.f32.mrb[0].mxu0
        %739 = vmatprep.mubr.bf16.mxu0 0
        %740 = vmatmul.mubr.bf16.gmra.mrb[0].mxu0 %v594
        %v741 = vpop.f32.mrb[0].mxu0
        %v742 = vadd.f32 %v553, %v741
        %v743 = vpop.f32.mrb[0].mxu0
        %v744 = vpop.f32.mrb[0].mxu0
        %v745 = vadd.f32 %v553, %v744
        %v746 = vpop.f32.mrb[0].mxu0
        %747 = vdwg.mxu0
        %vm748 = vcmp.gt.f32.partialorder %v686, 0.0
        %vm749 = vcmp.gt.f32.partialorder %v689, 0.0
        %vm750 = vcmp.gt.f32.partialorder %v694, 0.0
        %vm751 = vcmp.gt.f32.partialorder %v697, 0.0
        %vm752 = vcmp.gt.f32.partialorder %v702, 0.0
        %vm753 = vcmp.gt.f32.partialorder %v705, 0.0
        %vm754 = vcmp.gt.f32.partialorder %v710, 0.0
        %vm755 = vcmp.gt.f32.partialorder %v713, 0.0
        %vm756 = vcmp.gt.f32.partialorder %v718, 0.0
        %vm757 = vcmp.gt.f32.partialorder %v721, 0.0
        %vm758 = vcmp.gt.f32.partialorder %v726, 0.0
        %vm759 = vcmp.gt.f32.partialorder %v729, 0.0
        %vm760 = vcmp.gt.f32.partialorder %v734, 0.0
        %vm761 = vcmp.gt.f32.partialorder %v737, 0.0
        %vm762 = vcmp.gt.f32.partialorder %v742, 0.0
        %vm763 = vcmp.gt.f32.partialorder %v745, 0.0
        %v764 = vmul.f32 %v686, 0.1
        %v765 = vmul.f32 %v689, 0.1
        %v766 = vmul.f32 %v694, 0.1
        %v767 = vmul.f32 %v697, 0.1
        %v768 = vmul.f32 %v702, 0.1
        %v769 = vmul.f32 %v705, 0.1
        %v770 = vmul.f32 %v710, 0.1
        %v771 = vmul.f32 %v713, 0.1
        %v772 = vmul.f32 %v718, 0.1
        %v773 = vmul.f32 %v721, 0.1
        %v774 = vmul.f32 %v726, 0.1
        %v775 = vmul.f32 %v729, 0.1
        %v776 = vmul.f32 %v734, 0.1
        %v777 = vmul.f32 %v737, 0.1
        %v778 = vmul.f32 %v742, 0.1
        %v779 = vmul.f32 %v745, 0.1
        %v780 = vsel %vm748, %v686, %v764
        %v781 = vsel %vm749, %v689, %v765
        %v782 = vsel %vm750, %v694, %v766
        %v783 = vsel %vm751, %v697, %v767
        %v784 = vsel %vm752, %v702, %v768
        %v785 = vsel %vm753, %v705, %v769
        %v786 = vsel %vm754, %v710, %v770
        %v787 = vsel %vm755, %v713, %v771
        %v788 = vsel %vm756, %v718, %v772
        %v789 = vsel %vm757, %v721, %v773
        %v790 = vsel %vm758, %v726, %v774
        %v791 = vsel %vm759, %v729, %v775
        %v792 = vsel %vm760, %v734, %v776
        %v793 = vsel %vm761, %v737, %v777
        %v794 = vsel %vm762, %v742, %v778
        %v795 = vsel %vm763, %v745, %v779
        %796 = vst [vmem:[#allocation2 + $0x10] sm:$0xff] %v780
        %797 = vst [vmem:[#allocation2 + $0x18] sm:$0xff] %v781
        %798 = vst [vmem:[#allocation2 + $0x20] sm:$0xff] %v782
        %799 = vst [vmem:[#allocation2 + $0x28] sm:$0xff] %v783
        %800 = vst [vmem:[#allocation2 + $0x30] sm:$0xff] %v784
        %801 = vst [vmem:[#allocation2 + $0x38] sm:$0xff] %v785
        %802 = vst [vmem:[#allocation2 + $0x40] sm:$0xff] %v786
        %803 = vst [vmem:[#allocation2 + $0x48] sm:$0xff] %v787
        %804 = vst [vmem:[#allocation2 + $0x50] sm:$0xff] %v788
        %805 = vst [vmem:[#allocation2 + $0x58] sm:$0xff] %v789
        %806 = vst [vmem:[#allocation2 + $0x60] sm:$0xff] %v790
        %807 = vst [vmem:[#allocation2 + $0x68] sm:$0xff] %v791
        %808 = vst [vmem:[#allocation2 + $0x70] sm:$0xff] %v792
        %809 = vst [vmem:[#allocation2 + $0x78] sm:$0xff] %v793
        %810 = vst [vmem:[#allocation2 + $0x80] sm:$0xff] %v794
        %811 = vst [vmem:[#allocation2 + $0x88] sm:$0xff] %v795
        %v812 = vld [vmem:[#allocation2] sm:$0xff]
        %v813 = vld [vmem:[#allocation2 + $0x8] sm:$0xff]
        %v814 = vld [vmem:[#allocation2 + $0x10] sm:$0xff]
        %v815 = vld [vmem:[#allocation2 + $0x18] sm:$0xff]
        %v816 = vld [vmem:[#allocation2 + $0x20] sm:$0xff]
        %v817 = vld [vmem:[#allocation2 + $0x28] sm:$0xff]
        %v818 = vld [vmem:[#allocation2 + $0x30] sm:$0xff]
        %v819 = vld [vmem:[#allocation2 + $0x38] sm:$0xff]
        %v820 = vld [vmem:[#allocation2 + $0x40] sm:$0xff]
        %v821 = vld [vmem:[#allocation2 + $0x48] sm:$0xff]
        %v822 = vld [vmem:[#allocation2 + $0x50] sm:$0xff]
        %v823 = vld [vmem:[#allocation2 + $0x58] sm:$0xff]
        %v824 = vld [vmem:[#allocation2 + $0x60] sm:$0xff]
        %v825 = vld [vmem:[#allocation2 + $0x68] sm:$0xff]
        %v826 = vld [vmem:[#allocation2 + $0x70] sm:$0xff]
        %v827 = vld [vmem:[#allocation2 + $0x78] sm:$0xff]
        %v828 = vld [vmem:[#allocation2 + $0x80] sm:$0xff]
        %v829 = vld [vmem:[#allocation2 + $0x88] sm:$0xff]
        %v830 = vld [vmem:[#allocation2 + $0x90] sm:$0xff]
        %v831 = vld [vmem:[#allocation2 + $0x98] sm:$0xff]
        %v832 = vlaneseq
        %v833 = vshrl.u32 %v832, 7
        %v834 = vadd.s32 %v833, 8
        %v835 = vadd.s32 %v833, 16
        %v836 = vadd.s32 %v833, 24
        %v837 = vadd.s32 %v833, 32
        %v838 = vadd.s32 %v833, 40
        %v839 = vadd.s32 %v833, 48
        %v840 = vadd.s32 %v833, 56
        %v841 = vadd.s32 %v833, 64
        %v842 = vadd.s32 %v833, 72
        %v843 = vadd.s32 %v833, 80
        %v844 = vadd.s32 %v833, 88
        %v845 = vadd.s32 %v833, 96
        %v846 = vadd.s32 %v833, 104
        %v847 = vadd.s32 %v833, 112
        %v848 = vadd.s32 %v833, 120
        %vm849 = vcmp.lt.s32.totalorder %v833, 0
        %v850 = vsub.s32 0, %v833
        %v851 = vsel %vm849, %v850, %v833
        %v852 = vshrl.u32 %v851, 4
        %v853 = vand.u32 %v851, 15
        %v854 = vsub.s32 0, %v853
        %v855 = vsel %vm849, %v854, %v853
        %vm856 = vcmp.lt.s32.totalorder %v834, 0
        %v857 = vsub.s32 0, %v834
        %v858 = vsel %vm856, %v857, %v834
        %v859 = vshrl.u32 %v858, 4
        %v860 = vand.u32 %v858, 15
        %v861 = vsub.s32 0, %v860
        %v862 = vsel %vm856, %v861, %v860
        %vm863 = vcmp.lt.s32.totalorder %v835, 0
        %v864 = vsub.s32 0, %v835
        %v865 = vsel %vm863, %v864, %v835
        %v866 = vshrl.u32 %v865, 4
        %v867 = vand.u32 %v865, 15
        %v868 = vsub.s32 0, %v867
        %v869 = vsel %vm863, %v868, %v867
        %vm870 = vcmp.lt.s32.totalorder %v836, 0
        %v871 = vsub.s32 0, %v836
        %v872 = vsel %vm870, %v871, %v836
        %v873 = vshrl.u32 %v872, 4
        %v874 = vand.u32 %v872, 15
        %v875 = vsub.s32 0, %v874
        %v876 = vsel %vm870, %v875, %v874
        %vm877 = vcmp.lt.s32.totalorder %v837, 0
        %v878 = vsub.s32 0, %v837
        %v879 = vsel %vm877, %v878, %v837
        %v880 = vshrl.u32 %v879, 4
        %v881 = vand.u32 %v879, 15
        %v882 = vsub.s32 0, %v881
        %v883 = vsel %vm877, %v882, %v881
        %vm884 = vcmp.lt.s32.totalorder %v838, 0
        %v885 = vsub.s32 0, %v838
        %v886 = vsel %vm884, %v885, %v838
        %v887 = vshrl.u32 %v886, 4
        %v888 = vand.u32 %v886, 15
        %v889 = vsub.s32 0, %v888
        %v890 = vsel %vm884, %v889, %v888
        %vm891 = vcmp.lt.s32.totalorder %v839, 0
        %v892 = vsub.s32 0, %v839
        %v893 = vsel %vm891, %v892, %v839
        %v894 = vshrl.u32 %v893, 4
        %v895 = vand.u32 %v893, 15
        %v896 = vsub.s32 0, %v895
        %v897 = vsel %vm891, %v896, %v895
        %vm898 = vcmp.lt.s32.totalorder %v840, 0
        %v899 = vsub.s32 0, %v840
        %v900 = vsel %vm898, %v899, %v840
        %v901 = vshrl.u32 %v900, 4
        %v902 = vand.u32 %v900, 15
        %v903 = vsub.s32 0, %v902
        %v904 = vsel %vm898, %v903, %v902
        %vm905 = vcmp.lt.s32.totalorder %v841, 0
        %v906 = vsub.s32 0, %v841
        %v907 = vsel %vm905, %v906, %v841
        %v908 = vshrl.u32 %v907, 4
        %v909 = vand.u32 %v907, 15
        %v910 = vsub.s32 0, %v909
        %v911 = vsel %vm905, %v910, %v909
        %vm912 = vcmp.lt.s32.totalorder %v842, 0
        %v913 = vsub.s32 0, %v842
        %v914 = vsel %vm912, %v913, %v842
        %v915 = vshrl.u32 %v914, 4
        %v916 = vand.u32 %v914, 15
        %v917 = vsub.s32 0, %v916
        %v918 = vsel %vm912, %v917, %v916
        %vm919 = vcmp.lt.s32.totalorder %v843, 0
        %v920 = vsub.s32 0, %v843
        %v921 = vsel %vm919, %v920, %v843
        %v922 = vshrl.u32 %v921, 4
        %v923 = vand.u32 %v921, 15
        %v924 = vsub.s32 0, %v923
        %v925 = vsel %vm919, %v924, %v923
        %vm926 = vcmp.lt.s32.totalorder %v844, 0
        %v927 = vsub.s32 0, %v844
        %v928 = vsel %vm926, %v927, %v844
        %v929 = vshrl.u32 %v928, 4
        %v930 = vand.u32 %v928, 15
        %v931 = vsub.s32 0, %v930
        %v932 = vsel %vm926, %v931, %v930
        %vm933 = vcmp.lt.s32.totalorder %v845, 0
        %v934 = vsub.s32 0, %v845
        %v935 = vsel %vm933, %v934, %v845
        %v936 = vshrl.u32 %v935, 4
        %v937 = vand.u32 %v935, 15
        %v938 = vsub.s32 0, %v937
        %v939 = vsel %vm933, %v938, %v937
        %vm940 = vcmp.lt.s32.totalorder %v846, 0
        %v941 = vsub.s32 0, %v846
        %v942 = vsel %vm940, %v941, %v846
        %v943 = vshrl.u32 %v942, 4
        %v944 = vand.u32 %v942, 15
        %v945 = vsub.s32 0, %v944
        %v946 = vsel %vm940, %v945, %v944
        %vm947 = vcmp.lt.s32.totalorder %v847, 0
        %v948 = vsub.s32 0, %v847
        %v949 = vsel %vm947, %v948, %v847
        %v950 = vshrl.u32 %v949, 4
        %v951 = vand.u32 %v949, 15
        %v952 = vsub.s32 0, %v951
        %v953 = vsel %vm947, %v952, %v951
        %vm954 = vcmp.lt.s32.totalorder %v848, 0
        %v955 = vsub.s32 0, %v848
        %v956 = vsel %vm954, %v955, %v848
        %v957 = vshrl.u32 %v956, 4
        %v958 = vand.u32 %v956, 15
        %v959 = vsub.s32 0, %v958
        %v960 = vsel %vm954, %v959, %v958
        %vm961 = vcmp.ne.s32.totalorder %v855, 0
        %vm962 = vcmp.ne.s32.totalorder %v862, 0
        %vm963 = vcmp.ne.s32.totalorder %v869, 0
        %vm964 = vcmp.ne.s32.totalorder %v876, 0
        %vm965 = vcmp.ne.s32.totalorder %v883, 0
        %vm966 = vcmp.ne.s32.totalorder %v890, 0
        %vm967 = vcmp.ne.s32.totalorder %v897, 0
        %vm968 = vcmp.ne.s32.totalorder %v904, 0
        %vm969 = vcmp.ne.s32.totalorder %v911, 0
        %vm970 = vcmp.ne.s32.totalorder %v918, 0
        %vm971 = vcmp.ne.s32.totalorder %v925, 0
        %vm972 = vcmp.ne.s32.totalorder %v932, 0
        %vm973 = vcmp.ne.s32.totalorder %v939, 0
        %vm974 = vcmp.ne.s32.totalorder %v946, 0
        %vm975 = vcmp.ne.s32.totalorder %v953, 0
        %vm976 = vcmp.ne.s32.totalorder %v960, 0
        %vm977 = vcmp.lt.s32.totalorder %v855, 0
        %vm978 = vcmp.lt.s32.totalorder %v862, 0
        %vm979 = vcmp.lt.s32.totalorder %v869, 0
        %vm980 = vcmp.lt.s32.totalorder %v876, 0
        %vm981 = vcmp.lt.s32.totalorder %v883, 0
        %vm982 = vcmp.lt.s32.totalorder %v890, 0
        %vm983 = vcmp.lt.s32.totalorder %v897, 0
        %vm984 = vcmp.lt.s32.totalorder %v904, 0
        %vm985 = vcmp.lt.s32.totalorder %v911, 0
        %vm986 = vcmp.lt.s32.totalorder %v918, 0
        %vm987 = vcmp.lt.s32.totalorder %v925, 0
        %vm988 = vcmp.lt.s32.totalorder %v932, 0
        %vm989 = vcmp.lt.s32.totalorder %v939, 0
        %vm990 = vcmp.lt.s32.totalorder %v946, 0
        %vm991 = vcmp.lt.s32.totalorder %v953, 0
        %vm992 = vcmp.lt.s32.totalorder %v960, 0
        %vm993 = vmand %vm977, %vm961
        %vm994 = vmand %vm978, %vm962
        %vm995 = vmand %vm979, %vm963
        %vm996 = vmand %vm980, %vm964
        %vm997 = vmand %vm981, %vm965
        %vm998 = vmand %vm982, %vm966
        %vm999 = vmand %vm983, %vm967
        %vm1000 = vmand %vm984, %vm968
        %vm1001 = vmand %vm985, %vm969
        %vm1002 = vmand %vm986, %vm970
        %vm1003 = vmand %vm987, %vm971
        %vm1004 = vmand %vm988, %vm972
        %vm1005 = vmand %vm989, %vm973
        %vm1006 = vmand %vm990, %vm974
        %vm1007 = vmand %vm991, %vm975
        %vm1008 = vmand %vm992, %vm976
        %v1009 = vadd.s32 %v855, 16
        %v1010 = vadd.s32 %v862, 16
        %v1011 = vadd.s32 %v869, 16
        %v1012 = vadd.s32 %v876, 16
        %v1013 = vadd.s32 %v883, 16
        %v1014 = vadd.s32 %v890, 16
        %v1015 = vadd.s32 %v897, 16
        %v1016 = vadd.s32 %v904, 16
        %v1017 = vadd.s32 %v911, 16
        %v1018 = vadd.s32 %v918, 16
        %v1019 = vadd.s32 %v925, 16
        %v1020 = vadd.s32 %v932, 16
        %v1021 = vadd.s32 %v939, 16
        %v1022 = vadd.s32 %v946, 16
        %v1023 = vadd.s32 %v953, 16
        %v1024 = vadd.s32 %v960, 16
        %v1025 = vsel %vm993, %v1009, %v855
        %v1026 = vsel %vm994, %v1010, %v862
        %v1027 = vsel %vm995, %v1011, %v869
        %v1028 = vsel %vm996, %v1012, %v876
        %v1029 = vsel %vm997, %v1013, %v883
        %v1030 = vsel %vm998, %v1014, %v890
        %v1031 = vsel %vm999, %v1015, %v897
        %v1032 = vsel %vm1000, %v1016, %v904
        %v1033 = vsel %vm1001, %v1017, %v911
        %v1034 = vsel %vm1002, %v1018, %v918
        %v1035 = vsel %vm1003, %v1019, %v925
        %v1036 = vsel %vm1004, %v1020, %v932
        %v1037 = vsel %vm1005, %v1021, %v939
        %v1038 = vsel %vm1006, %v1022, %v946
        %v1039 = vsel %vm1007, %v1023, %v953
        %v1040 = vsel %vm1008, %v1024, %v960
        %v1041 = vrot.slane %v812, 7
        %v1042 = vrot.slane %v813, 7
        %v1043 = vrot.slane %v814, 7
        %v1044 = vrot.slane %v815, 7
        %v1045 = vrot.slane %v816, 7
        %v1046 = vrot.slane %v817, 7
        %v1047 = vrot.slane %v818, 7
        %v1048 = vrot.slane %v819, 7
        %v1049 = vrot.slane %v820, 7
        %v1050 = vrot.slane %v821, 7
        %v1051 = vrot.slane %v822, 7
        %v1052 = vrot.slane %v823, 7
        %v1053 = vrot.slane %v824, 7
        %v1054 = vrot.slane %v825, 7
        %v1055 = vrot.slane %v826, 7
        %v1056 = vrot.slane %v827, 7
        %v1057 = vrot.slane %v831, 7
        %vm1058 = vcmp.lt.s32.totalorder %v833, 1
        %v1059 = vsel %vm1058, %v1055, %v1056
        %v1060 = vsel %vm1058, %v1054, %v1055
        %v1061 = vsel %vm1058, %v1053, %v1054
        %v1062 = vsel %vm1058, %v1052, %v1053
        %v1063 = vsel %vm1058, %v1051, %v1052
        %v1064 = vsel %vm1058, %v1050, %v1051
        %v1065 = vsel %vm1058, %v1049, %v1050
        %v1066 = vsel %vm1058, %v1048, %v1049
        %v1067 = vsel %vm1058, %v1047, %v1048
        %v1068 = vsel %vm1058, %v1046, %v1047
        %v1069 = vsel %vm1058, %v1045, %v1046
        %v1070 = vsel %vm1058, %v1044, %v1045
        %v1071 = vsel %vm1058, %v1043, %v1044
        %v1072 = vsel %vm1058, %v1042, %v1043
        %v1073 = vsel %vm1058, %v1041, %v1042
        %v1074 = vsel %vm1058, %v1057, %v1041
        %vm1075 = vcmp.ge.s32.totalorder %v1025, 1
        %vm1076 = vcmp.ge.s32.totalorder %v1026, 1
        %vm1077 = vcmp.ge.s32.totalorder %v1027, 1
        %vm1078 = vcmp.ge.s32.totalorder %v1028, 1
        %vm1079 = vcmp.ge.s32.totalorder %v1029, 1
        %vm1080 = vcmp.ge.s32.totalorder %v1030, 1
        %vm1081 = vcmp.ge.s32.totalorder %v1031, 1
        %vm1082 = vcmp.ge.s32.totalorder %v1032, 1
        %vm1083 = vcmp.ge.s32.totalorder %v1033, 1
        %vm1084 = vcmp.ge.s32.totalorder %v1034, 1
        %vm1085 = vcmp.ge.s32.totalorder %v1035, 1
        %vm1086 = vcmp.ge.s32.totalorder %v1036, 1
        %vm1087 = vcmp.ge.s32.totalorder %v1037, 1
        %vm1088 = vcmp.ge.s32.totalorder %v1038, 1
        %vm1089 = vcmp.ge.s32.totalorder %v1039, 1
        %vm1090 = vcmp.ge.s32.totalorder %v1040, 1
        %v1091 = vsel %vm1075, 1, 0
        %v1092 = vsel %vm1076, 1, 0
        %v1093 = vsel %vm1077, 1, 0
        %v1094 = vsel %vm1078, 1, 0
        %v1095 = vsel %vm1079, 1, 0
        %v1096 = vsel %vm1080, 1, 0
        %v1097 = vsel %vm1081, 1, 0
        %v1098 = vsel %vm1082, 1, 0
        %v1099 = vsel %vm1083, 1, 0
        %v1100 = vsel %vm1084, 1, 0
        %v1101 = vsel %vm1085, 1, 0
        %v1102 = vsel %vm1086, 1, 0
        %v1103 = vsel %vm1087, 1, 0
        %v1104 = vsel %vm1088, 1, 0
        %v1105 = vsel %vm1089, 1, 0
        %v1106 = vsel %vm1090, 1, 0
        %vm1107 = vcmp.eq.s32.totalorder %v1091, 1
        %vm1108 = vcmp.eq.s32.totalorder %v1092, 1
        %vm1109 = vcmp.eq.s32.totalorder %v1093, 1
        %vm1110 = vcmp.eq.s32.totalorder %v1094, 1
        %vm1111 = vcmp.eq.s32.totalorder %v1095, 1
        %vm1112 = vcmp.eq.s32.totalorder %v1096, 1
        %vm1113 = vcmp.eq.s32.totalorder %v1097, 1
        %vm1114 = vcmp.eq.s32.totalorder %v1098, 1
        %vm1115 = vcmp.eq.s32.totalorder %v1099, 1
        %vm1116 = vcmp.eq.s32.totalorder %v1100, 1
        %vm1117 = vcmp.eq.s32.totalorder %v1101, 1
        %vm1118 = vcmp.eq.s32.totalorder %v1102, 1
        %vm1119 = vcmp.eq.s32.totalorder %v1103, 1
        %vm1120 = vcmp.eq.s32.totalorder %v1104, 1
        %vm1121 = vcmp.eq.s32.totalorder %v1105, 1
        %vm1122 = vcmp.eq.s32.totalorder %v1106, 1
        %v1123 = vsel %vm1107, %v1074, 0.0
        %v1124 = vsel %vm1108, %v1073, 0.0
        %v1125 = vsel %vm1109, %v1072, 0.0
        %v1126 = vsel %vm1110, %v1071, 0.0
        %v1127 = vsel %vm1111, %v1070, 0.0
        %v1128 = vsel %vm1112, %v1069, 0.0
        %v1129 = vsel %vm1113, %v1068, 0.0
        %v1130 = vsel %vm1114, %v1067, 0.0
        %v1131 = vsel %vm1115, %v1066, 0.0
        %v1132 = vsel %vm1116, %v1065, 0.0
        %v1133 = vsel %vm1117, %v1064, 0.0
        %v1134 = vsel %vm1118, %v1063, 0.0
        %v1135 = vsel %vm1119, %v1062, 0.0
        %v1136 = vsel %vm1120, %v1061, 0.0
        %v1137 = vsel %vm1121, %v1060, 0.0
        %v1138 = vsel %vm1122, %v1059, 0.0
        %v1139 = vpack.c.bf16 %v1124, %v1123
        %v1140 = vpack.c.bf16 %v1126, %v1125
        %v1141 = vpack.c.bf16 %v1128, %v1127
        %v1142 = vpack.c.bf16 %v1130, %v1129
        %v1143 = vpack.c.bf16 %v1132, %v1131
        %v1144 = vpack.c.bf16 %v1134, %v1133
        %v1145 = vpack.c.bf16 %v1136, %v1135
        %v1146 = vpack.c.bf16 %v1138, %v1137
        %1147 = vst [vmem:[#allocation3] sm:$0xff] %v1139
        %1148 = vst [vmem:[#allocation3 + $0x48] sm:$0xff] %v1140
        %1149 = vst [vmem:[#allocation3 + $0x90] sm:$0xff] %v1141
        %1150 = vst [vmem:[#allocation3 + $0xd8] sm:$0xff] %v1142
        %1151 = vst [vmem:[#allocation3 + $0x120] sm:$0xff] %v1143
        %1152 = vst [vmem:[#allocation3 + $0x168] sm:$0xff] %v1144
        %1153 = vst [vmem:[#allocation3 + $0x1b0] sm:$0xff] %v1145
        %1154 = vst [vmem:[#allocation3 + $0x1f8] sm:$0xff] %v1146
        %v1155 = vpack.c.bf16 %v813, %v812
        %v1156 = vpack.c.bf16 %v815, %v814
        %v1157 = vpack.c.bf16 %v817, %v816
        %v1158 = vpack.c.bf16 %v819, %v818
        %v1159 = vpack.c.bf16 %v821, %v820
        %v1160 = vpack.c.bf16 %v823, %v822
        %v1161 = vpack.c.bf16 %v825, %v824
        %v1162 = vpack.c.bf16 %v827, %v826
        %1163 = vst [vmem:[#allocation3 + $0x8] sm:$0xff] %v1155
        %1164 = vst [vmem:[#allocation3 + $0x50] sm:$0xff] %v1156
        %1165 = vst [vmem:[#allocation3 + $0x98] sm:$0xff] %v1157
        %1166 = vst [vmem:[#allocation3 + $0xe0] sm:$0xff] %v1158
        %1167 = vst [vmem:[#allocation3 + $0x128] sm:$0xff] %v1159
        %1168 = vst [vmem:[#allocation3 + $0x170] sm:$0xff] %v1160
        %1169 = vst [vmem:[#allocation3 + $0x1b8] sm:$0xff] %v1161
        %1170 = vst [vmem:[#allocation3 + $0x200] sm:$0xff] %v1162
        %v1171 = vrot.slane %v812, 1
        %v1172 = vrot.slane %v813, 1
        %v1173 = vrot.slane %v814, 1
        %v1174 = vrot.slane %v815, 1
        %v1175 = vrot.slane %v816, 1
        %v1176 = vrot.slane %v817, 1
        %v1177 = vrot.slane %v818, 1
        %v1178 = vrot.slane %v819, 1
        %v1179 = vrot.slane %v820, 1
        %v1180 = vrot.slane %v821, 1
        %v1181 = vrot.slane %v822, 1
        %v1182 = vrot.slane %v823, 1
        %v1183 = vrot.slane %v824, 1
        %v1184 = vrot.slane %v825, 1
        %v1185 = vrot.slane %v826, 1
        %v1186 = vrot.slane %v827, 1
        %v1187 = vrot.slane %v828, 1
        %vm1188 = vcmp.lt.s32.totalorder %v833, 7
        %v1189 = vsel %vm1188, %v1186, %v1187
        %v1190 = vsel %vm1188, %v1185, %v1186
        %v1191 = vsel %vm1188, %v1184, %v1185
        %v1192 = vsel %vm1188, %v1183, %v1184
        %v1193 = vsel %vm1188, %v1182, %v1183
        %v1194 = vsel %vm1188, %v1181, %v1182
        %v1195 = vsel %vm1188, %v1180, %v1181
        %v1196 = vsel %vm1188, %v1179, %v1180
        %v1197 = vsel %vm1188, %v1178, %v1179
        %v1198 = vsel %vm1188, %v1177, %v1178
        %v1199 = vsel %vm1188, %v1176, %v1177
        %v1200 = vsel %vm1188, %v1175, %v1176
        %v1201 = vsel %vm1188, %v1174, %v1175
        %v1202 = vsel %vm1188, %v1173, %v1174
        %v1203 = vsel %vm1188, %v1172, %v1173
        %v1204 = vsel %vm1188, %v1171, %v1172
        %vm1205 = vcmp.le.s32.totalorder %v1025, 14
        %vm1206 = vcmp.le.s32.totalorder %v1026, 14
        %vm1207 = vcmp.le.s32.totalorder %v1027, 14
        %vm1208 = vcmp.le.s32.totalorder %v1028, 14
        %vm1209 = vcmp.le.s32.totalorder %v1029, 14
        %vm1210 = vcmp.le.s32.totalorder %v1030, 14
        %vm1211 = vcmp.le.s32.totalorder %v1031, 14
        %vm1212 = vcmp.le.s32.totalorder %v1032, 14
        %vm1213 = vcmp.le.s32.totalorder %v1033, 14
        %vm1214 = vcmp.le.s32.totalorder %v1034, 14
        %vm1215 = vcmp.le.s32.totalorder %v1035, 14
        %vm1216 = vcmp.le.s32.totalorder %v1036, 14
        %vm1217 = vcmp.le.s32.totalorder %v1037, 14
        %vm1218 = vcmp.le.s32.totalorder %v1038, 14
        %vm1219 = vcmp.le.s32.totalorder %v1039, 14
        %vm1220 = vcmp.le.s32.totalorder %v1040, 14
        %v1221 = vsel %vm1205, 1, 0
        %v1222 = vsel %vm1206, 1, 0
        %v1223 = vsel %vm1207, 1, 0
        %v1224 = vsel %vm1208, 1, 0
        %v1225 = vsel %vm1209, 1, 0
        %v1226 = vsel %vm1210, 1, 0
        %v1227 = vsel %vm1211, 1, 0
        %v1228 = vsel %vm1212, 1, 0
        %v1229 = vsel %vm1213, 1, 0
        %v1230 = vsel %vm1214, 1, 0
        %v1231 = vsel %vm1215, 1, 0
        %v1232 = vsel %vm1216, 1, 0
        %v1233 = vsel %vm1217, 1, 0
        %v1234 = vsel %vm1218, 1, 0
        %v1235 = vsel %vm1219, 1, 0
        %v1236 = vsel %vm1220, 1, 0
        %vm1237 = vcmp.eq.s32.totalorder %v1221, 1
        %vm1238 = vcmp.eq.s32.totalorder %v1222, 1
        %vm1239 = vcmp.eq.s32.totalorder %v1223, 1
        %vm1240 = vcmp.eq.s32.totalorder %v1224, 1
        %vm1241 = vcmp.eq.s32.totalorder %v1225, 1
        %vm1242 = vcmp.eq.s32.totalorder %v1226, 1
        %vm1243 = vcmp.eq.s32.totalorder %v1227, 1
        %vm1244 = vcmp.eq.s32.totalorder %v1228, 1
        %vm1245 = vcmp.eq.s32.totalorder %v1229, 1
        %vm1246 = vcmp.eq.s32.totalorder %v1230, 1
        %vm1247 = vcmp.eq.s32.totalorder %v1231, 1
        %vm1248 = vcmp.eq.s32.totalorder %v1232, 1
        %vm1249 = vcmp.eq.s32.totalorder %v1233, 1
        %vm1250 = vcmp.eq.s32.totalorder %v1234, 1
        %vm1251 = vcmp.eq.s32.totalorder %v1235, 1
        %vm1252 = vcmp.eq.s32.totalorder %v1236, 1
        %v1253 = vsel %vm1237, %v1204, 0.0
        %v1254 = vsel %vm1238, %v1203, 0.0
        %v1255 = vsel %vm1239, %v1202, 0.0
        %v1256 = vsel %vm1240, %v1201, 0.0
        %v1257 = vsel %vm1241, %v1200, 0.0
        %v1258 = vsel %vm1242, %v1199, 0.0
        %v1259 = vsel %vm1243, %v1198, 0.0
        %v1260 = vsel %vm1244, %v1197, 0.0
        %v1261 = vsel %vm1245, %v1196, 0.0
        %v1262 = vsel %vm1246, %v1195, 0.0
        %v1263 = vsel %vm1247, %v1194, 0.0
        %v1264 = vsel %vm1248, %v1193, 0.0
        %v1265 = vsel %vm1249, %v1192, 0.0
        %v1266 = vsel %vm1250, %v1191, 0.0
        %v1267 = vsel %vm1251, %v1190, 0.0
        %v1268 = vsel %vm1252, %v1189, 0.0
        %v1269 = vpack.c.bf16 %v1254, %v1253
        %v1270 = vpack.c.bf16 %v1256, %v1255
        %v1271 = vpack.c.bf16 %v1258, %v1257
        %v1272 = vpack.c.bf16 %v1260, %v1259
        %v1273 = vpack.c.bf16 %v1262, %v1261
        %v1274 = vpack.c.bf16 %v1264, %v1263
        %v1275 = vpack.c.bf16 %v1266, %v1265
        %v1276 = vpack.c.bf16 %v1268, %v1267
        %1277 = vst [vmem:[#allocation3 + $0x10] sm:$0xff] %v1269
        %1278 = vst [vmem:[#allocation3 + $0x58] sm:$0xff] %v1270
        %1279 = vst [vmem:[#allocation3 + $0xa0] sm:$0xff] %v1271
        %1280 = vst [vmem:[#allocation3 + $0xe8] sm:$0xff] %v1272
        %1281 = vst [vmem:[#allocation3 + $0x130] sm:$0xff] %v1273
        %1282 = vst [vmem:[#allocation3 + $0x178] sm:$0xff] %v1274
        %1283 = vst [vmem:[#allocation3 + $0x1c0] sm:$0xff] %v1275
        %1284 = vst [vmem:[#allocation3 + $0x208] sm:$0xff] %v1276
        %v1285 = vrot.slane %v828, 7
        %v1286 = vrot.slane %v829, 7
        %v1287 = vsel %vm1058, %v1285, %v1286
        %v1288 = vsel %vm1058, %v1056, %v1285
        %v1289 = vsel %vm1107, %v1072, 0.0
        %v1290 = vsel %vm1108, %v1071, 0.0
        %v1291 = vsel %vm1109, %v1070, 0.0
        %v1292 = vsel %vm1110, %v1069, 0.0
        %v1293 = vsel %vm1111, %v1068, 0.0
        %v1294 = vsel %vm1112, %v1067, 0.0
        %v1295 = vsel %vm1113, %v1066, 0.0
        %v1296 = vsel %vm1114, %v1065, 0.0
        %v1297 = vsel %vm1115, %v1064, 0.0
        %v1298 = vsel %vm1116, %v1063, 0.0
        %v1299 = vsel %vm1117, %v1062, 0.0
        %v1300 = vsel %vm1118, %v1061, 0.0
        %v1301 = vsel %vm1119, %v1060, 0.0
        %v1302 = vsel %vm1120, %v1059, 0.0
        %v1303 = vsel %vm1121, %v1288, 0.0
        %v1304 = vsel %vm1122, %v1287, 0.0
        %v1305 = vpack.c.bf16 %v1290, %v1289
        %v1306 = vpack.c.bf16 %v1292, %v1291
        %v1307 = vpack.c.bf16 %v1294, %v1293
        %v1308 = vpack.c.bf16 %v1296, %v1295
        %v1309 = vpack.c.bf16 %v1298, %v1297
        %v1310 = vpack.c.bf16 %v1300, %v1299
        %v1311 = vpack.c.bf16 %v1302, %v1301
        %v1312 = vpack.c.bf16 %v1304, %v1303
        %1313 = vst [vmem:[#allocation3 + $0x18] sm:$0xff] %v1305
        %1314 = vst [vmem:[#allocation3 + $0x60] sm:$0xff] %v1306
        %1315 = vst [vmem:[#allocation3 + $0xa8] sm:$0xff] %v1307
        %1316 = vst [vmem:[#allocation3 + $0xf0] sm:$0xff] %v1308
        %1317 = vst [vmem:[#allocation3 + $0x138] sm:$0xff] %v1309
        %1318 = vst [vmem:[#allocation3 + $0x180] sm:$0xff] %v1310
        %1319 = vst [vmem:[#allocation3 + $0x1c8] sm:$0xff] %v1311
        %1320 = vst [vmem:[#allocation3 + $0x210] sm:$0xff] %v1312
        %v1321 = vpack.c.bf16 %v829, %v828
        %1322 = vst [vmem:[#allocation3 + $0x20] sm:$0xff] %v1156
        %1323 = vst [vmem:[#allocation3 + $0x68] sm:$0xff] %v1157
        %1324 = vst [vmem:[#allocation3 + $0xb0] sm:$0xff] %v1158
        %1325 = vst [vmem:[#allocation3 + $0xf8] sm:$0xff] %v1159
        %1326 = vst [vmem:[#allocation3 + $0x140] sm:$0xff] %v1160
        %1327 = vst [vmem:[#allocation3 + $0x188] sm:$0xff] %v1161
        %1328 = vst [vmem:[#allocation3 + $0x1d0] sm:$0xff] %v1162
        %1329 = vst [vmem:[#allocation3 + $0x218] sm:$0xff] %v1321
        %v1330 = vrot.slane %v829, 1
        %v1331 = vrot.slane %v830, 1
        %v1332 = vsel %vm1188, %v1330, %v1331
        %v1333 = vsel %vm1188, %v1187, %v1330
        %v1334 = vsel %vm1237, %v1202, 0.0
        %v1335 = vsel %vm1238, %v1201, 0.0
        %v1336 = vsel %vm1239, %v1200, 0.0
        %v1337 = vsel %vm1240, %v1199, 0.0
        %v1338 = vsel %vm1241, %v1198, 0.0
        %v1339 = vsel %vm1242, %v1197, 0.0
        %v1340 = vsel %vm1243, %v1196, 0.0
        %v1341 = vsel %vm1244, %v1195, 0.0
        %v1342 = vsel %vm1245, %v1194, 0.0
        %v1343 = vsel %vm1246, %v1193, 0.0
        %v1344 = vsel %vm1247, %v1192, 0.0
        %v1345 = vsel %vm1248, %v1191, 0.0
        %v1346 = vsel %vm1249, %v1190, 0.0
        %v1347 = vsel %vm1250, %v1189, 0.0
        %v1348 = vsel %vm1251, %v1333, 0.0
        %v1349 = vsel %vm1252, %v1332, 0.0
        %v1350 = vpack.c.bf16 %v1335, %v1334
        %v1351 = vpack.c.bf16 %v1337, %v1336
        %v1352 = vpack.c.bf16 %v1339, %v1338
        %v1353 = vpack.c.bf16 %v1341, %v1340
        %v1354 = vpack.c.bf16 %v1343, %v1342
        %v1355 = vpack.c.bf16 %v1345, %v1344
        %v1356 = vpack.c.bf16 %v1347, %v1346
        %v1357 = vpack.c.bf16 %v1349, %v1348
        %1358 = vst [vmem:[#allocation3 + $0x28] sm:$0xff] %v1350
        %1359 = vst [vmem:[#allocation3 + $0x70] sm:$0xff] %v1351
        %1360 = vst [vmem:[#allocation3 + $0xb8] sm:$0xff] %v1352
        %1361 = vst [vmem:[#allocation3 + $0x100] sm:$0xff] %v1353
        %1362 = vst [vmem:[#allocation3 + $0x148] sm:$0xff] %v1354
        %1363 = vst [vmem:[#allocation3 + $0x190] sm:$0xff] %v1355
        %1364 = vst [vmem:[#allocation3 + $0x1d8] sm:$0xff] %v1356
        %1365 = vst [vmem:[#allocation3 + $0x220] sm:$0xff] %v1357
        %v1366 = vrot.slane %v830, 7
        %v1367 = vsel %vm1058, %v1366, %v1057
        %v1368 = vsel %vm1058, %v1286, %v1366
        %v1369 = vsel %vm1107, %v1070, 0.0
        %v1370 = vsel %vm1108, %v1069, 0.0
        %v1371 = vsel %vm1109, %v1068, 0.0
        %v1372 = vsel %vm1110, %v1067, 0.0
        %v1373 = vsel %vm1111, %v1066, 0.0
        %v1374 = vsel %vm1112, %v1065, 0.0
        %v1375 = vsel %vm1113, %v1064, 0.0
        %v1376 = vsel %vm1114, %v1063, 0.0
        %v1377 = vsel %vm1115, %v1062, 0.0
        %v1378 = vsel %vm1116, %v1061, 0.0
        %v1379 = vsel %vm1117, %v1060, 0.0
        %v1380 = vsel %vm1118, %v1059, 0.0
        %v1381 = vsel %vm1119, %v1288, 0.0
        %v1382 = vsel %vm1120, %v1287, 0.0
        %v1383 = vsel %vm1121, %v1368, 0.0
        %v1384 = vsel %vm1122, %v1367, 0.0
        %v1385 = vpack.c.bf16 %v1370, %v1369
        %v1386 = vpack.c.bf16 %v1372, %v1371
        %v1387 = vpack.c.bf16 %v1374, %v1373
        %v1388 = vpack.c.bf16 %v1376, %v1375
        %v1389 = vpack.c.bf16 %v1378, %v1377
        %v1390 = vpack.c.bf16 %v1380, %v1379
        %v1391 = vpack.c.bf16 %v1382, %v1381
        %v1392 = vpack.c.bf16 %v1384, %v1383
        %1393 = vst [vmem:[#allocation3 + $0x30] sm:$0xff] %v1385
        %1394 = vst [vmem:[#allocation3 + $0x78] sm:$0xff] %v1386
        %1395 = vst [vmem:[#allocation3 + $0xc0] sm:$0xff] %v1387
        %1396 = vst [vmem:[#allocation3 + $0x108] sm:$0xff] %v1388
        %1397 = vst [vmem:[#allocation3 + $0x150] sm:$0xff] %v1389
        %1398 = vst [vmem:[#allocation3 + $0x198] sm:$0xff] %v1390
        %1399 = vst [vmem:[#allocation3 + $0x1e0] sm:$0xff] %v1391
        %1400 = vst [vmem:[#allocation3 + $0x228] sm:$0xff] %v1392
        %v1401 = vpack.c.bf16 %v831, %v830
        %1402 = vst [vmem:[#allocation3 + $0x38] sm:$0xff] %v1157
        %1403 = vst [vmem:[#allocation3 + $0x80] sm:$0xff] %v1158
        %1404 = vst [vmem:[#allocation3 + $0xc8] sm:$0xff] %v1159
        %1405 = vst [vmem:[#allocation3 + $0x110] sm:$0xff] %v1160
        %1406 = vst [vmem:[#allocation3 + $0x158] sm:$0xff] %v1161
        %1407 = vst [vmem:[#allocation3 + $0x1a0] sm:$0xff] %v1162
        %1408 = vst [vmem:[#allocation3 + $0x1e8] sm:$0xff] %v1321
        %1409 = vst [vmem:[#allocation3 + $0x230] sm:$0xff] %v1401
        %v1410 = vrot.slane %v831, 1
        %v1411 = vsel %vm1188, %v1331, %v1410
        %v1412 = vsel %vm1188, %v1410, %v1171
        %v1413 = vsel %vm1237, %v1200, 0.0
        %v1414 = vsel %vm1238, %v1199, 0.0
        %v1415 = vsel %vm1239, %v1198, 0.0
        %v1416 = vsel %vm1240, %v1197, 0.0
        %v1417 = vsel %vm1241, %v1196, 0.0
        %v1418 = vsel %vm1242, %v1195, 0.0
        %v1419 = vsel %vm1243, %v1194, 0.0
        %v1420 = vsel %vm1244, %v1193, 0.0
        %v1421 = vsel %vm1245, %v1192, 0.0
        %v1422 = vsel %vm1246, %v1191, 0.0
        %v1423 = vsel %vm1247, %v1190, 0.0
        %v1424 = vsel %vm1248, %v1189, 0.0
        %v1425 = vsel %vm1249, %v1333, 0.0
        %v1426 = vsel %vm1250, %v1332, 0.0
        %v1427 = vsel %vm1251, %v1411, 0.0
        %v1428 = vsel %vm1252, %v1412, 0.0
        %v1429 = vpack.c.bf16 %v1414, %v1413
        %v1430 = vpack.c.bf16 %v1416, %v1415
        %v1431 = vpack.c.bf16 %v1418, %v1417
        %v1432 = vpack.c.bf16 %v1420, %v1419
        %v1433 = vpack.c.bf16 %v1422, %v1421
        %v1434 = vpack.c.bf16 %v1424, %v1423
        %v1435 = vpack.c.bf16 %v1426, %v1425
        %v1436 = vpack.c.bf16 %v1428, %v1427
        %1437 = vst [vmem:[#allocation3 + $0x40] sm:$0xff] %v1429
        %1438 = vst [vmem:[#allocation3 + $0x88] sm:$0xff] %v1430
        %1439 = vst [vmem:[#allocation3 + $0xd0] sm:$0xff] %v1431
        %1440 = vst [vmem:[#allocation3 + $0x118] sm:$0xff] %v1432
        %1441 = vst [vmem:[#allocation3 + $0x160] sm:$0xff] %v1433
        %1442 = vst [vmem:[#allocation3 + $0x1a8] sm:$0xff] %v1434
        %1443 = vst [vmem:[#allocation3 + $0x1f0] sm:$0xff] %v1435
        %1444 = vst [vmem:[#allocation3 + $0x238] sm:$0xff] %v1436
        %v1445 = vld [vmem:[#allocation3] sm:$0xff]
        %v1446 = vld [vmem:[#allocation3 + $0x8] sm:$0xff]
        %v1447 = vld [vmem:[#allocation3 + $0x10] sm:$0xff]
        %v1448 = vld [vmem:[#allocation3 + $0x18] sm:$0xff]
        %v1449 = vld [vmem:[#allocation3 + $0x20] sm:$0xff]
        %v1450 = vld [vmem:[#allocation3 + $0x28] sm:$0xff]
        %v1451 = vld [vmem:[#allocation3 + $0x30] sm:$0xff]
        %v1452 = vld [vmem:[#allocation3 + $0x38] sm:$0xff]
        %v1453 = vld [vmem:[#allocation3 + $0x40] sm:$0xff]
        %v1454 = vld [vmem:[#allocation3 + $0x48] sm:$0xff]
        %v1455 = vld [vmem:[#allocation3 + $0x50] sm:$0xff]
        %v1456 = vld [vmem:[#allocation3 + $0x58] sm:$0xff]
        %v1457 = vld [vmem:[#allocation3 + $0x60] sm:$0xff]
        %v1458 = vld [vmem:[#allocation3 + $0x68] sm:$0xff]
        %v1459 = vld [vmem:[#allocation3 + $0x70] sm:$0xff]
        %v1460 = vld [vmem:[#allocation3 + $0x78] sm:$0xff]
        %v1461 = vld [vmem:[#allocation3 + $0x80] sm:$0xff]
        %v1462 = vld [vmem:[#allocation3 + $0x88] sm:$0xff]
        %v1463 = vld [vmem:[#allocation3 + $0x90] sm:$0xff]
        %v1464 = vld [vmem:[#allocation3 + $0x98] sm:$0xff]
        %v1465 = vld [vmem:[#allocation3 + $0xa0] sm:$0xff]
        %v1466 = vld [vmem:[#allocation3 + $0xa8] sm:$0xff]
        %v1467 = vld [vmem:[#allocation3 + $0xb0] sm:$0xff]
        %v1468 = vld [vmem:[#allocation3 + $0xb8] sm:$0xff]
        %v1469 = vld [vmem:[#allocation3 + $0xc0] sm:$0xff]
        %v1470 = vld [vmem:[#allocation3 + $0xc8] sm:$0xff]
        %v1471 = vld [vmem:[#allocation3 + $0xd0] sm:$0xff]
        %v1472 = vld [vmem:[#allocation3 + $0xd8] sm:$0xff]
        %v1473 = vld [vmem:[#allocation3 + $0xe0] sm:$0xff]
        %v1474 = vld [vmem:[#allocation3 + $0xe8] sm:$0xff]
        %v1475 = vld [vmem:[#allocation3 + $0xf0] sm:$0xff]
        %v1476 = vld [vmem:[#allocation3 + $0xf8] sm:$0xff]
        %v1477 = vld [vmem:[#allocation3 + $0x100] sm:$0xff]
        %v1478 = vld [vmem:[#allocation3 + $0x108] sm:$0xff]
        %v1479 = vld [vmem:[#allocation3 + $0x110] sm:$0xff]
        %v1480 = vld [vmem:[#allocation3 + $0x118] sm:$0xff]
        %v1481 = vld [vmem:[#allocation3 + $0x120] sm:$0xff]
        %v1482 = vld [vmem:[#allocation3 + $0x128] sm:$0xff]
        %v1483 = vld [vmem:[#allocation3 + $0x130] sm:$0xff]
        %v1484 = vld [vmem:[#allocation3 + $0x138] sm:$0xff]
        %v1485 = vld [vmem:[#allocation3 + $0x140] sm:$0xff]
        %v1486 = vld [vmem:[#allocation3 + $0x148] sm:$0xff]
        %v1487 = vld [vmem:[#allocation3 + $0x150] sm:$0xff]
        %v1488 = vld [vmem:[#allocation3 + $0x158] sm:$0xff]
        %v1489 = vld [vmem:[#allocation3 + $0x160] sm:$0xff]
        %v1490 = vld [vmem:[#allocation3 + $0x168] sm:$0xff]
        %v1491 = vld [vmem:[#allocation3 + $0x170] sm:$0xff]
        %v1492 = vld [vmem:[#allocation3 + $0x178] sm:$0xff]
        %v1493 = vld [vmem:[#allocation3 + $0x180] sm:$0xff]
        %v1494 = vld [vmem:[#allocation3 + $0x188] sm:$0xff]
        %v1495 = vld [vmem:[#allocation3 + $0x190] sm:$0xff]
        %v1496 = vld [vmem:[#allocation3 + $0x198] sm:$0xff]
        %v1497 = vld [vmem:[#allocation3 + $0x1a0] sm:$0xff]
        %v1498 = vld [vmem:[#allocation3 + $0x1a8] sm:$0xff]
        %v1499 = vld [vmem:[#allocation3 + $0x1b0] sm:$0xff]
        %v1500 = vld [vmem:[#allocation3 + $0x1b8] sm:$0xff]
        %v1501 = vld [vmem:[#allocation3 + $0x1c0] sm:$0xff]
        %v1502 = vld [vmem:[#allocation3 + $0x1c8] sm:$0xff]
        %v1503 = vld [vmem:[#allocation3 + $0x1d0] sm:$0xff]
        %v1504 = vld [vmem:[#allocation3 + $0x1d8] sm:$0xff]
        %v1505 = vld [vmem:[#allocation3 + $0x1e0] sm:$0xff]
        %v1506 = vld [vmem:[#allocation3 + $0x1e8] sm:$0xff]
        %v1507 = vld [vmem:[#allocation3 + $0x1f0] sm:$0xff]
        %v1508 = vld [vmem:[#allocation3 + $0x1f8] sm:$0xff]
        %v1509 = vld [vmem:[#allocation3 + $0x200] sm:$0xff]
        %v1510 = vld [vmem:[#allocation3 + $0x208] sm:$0xff]
        %v1511 = vld [vmem:[#allocation3 + $0x210] sm:$0xff]
        %v1512 = vld [vmem:[#allocation3 + $0x218] sm:$0xff]
        %v1513 = vld [vmem:[#allocation3 + $0x220] sm:$0xff]
        %v1514 = vld [vmem:[#allocation3 + $0x228] sm:$0xff]
        %v1515 = vld [vmem:[#allocation3 + $0x230] sm:$0xff]
        %v1516 = vld [vmem:[#allocation3 + $0x238] sm:$0xff]
        %v1517 = vld [vmem:[#allocation10] sm:$0xf]
        %v1518 = vld [vmem:[#allocation10 + $0x4] sm:$0xf]
        %v1519 = vld [vmem:[#allocation10 + $0x8] sm:$0xf]
        %v1520 = vld [vmem:[#allocation10 + $0xc] sm:$0xf]
        %v1521 = vld [vmem:[#allocation10 + $0x10] sm:$0xf]
        %v1522 = vld [vmem:[#allocation10 + $0x14] sm:$0xf]
        %v1523 = vld [vmem:[#allocation10 + $0x18] sm:$0xf]
        %v1524 = vld [vmem:[#allocation10 + $0x1c] sm:$0xf]
        %v1525 = vld [vmem:[#allocation10 + $0x20] sm:$0xf]
        %v1526 = vld [vmem:[#allocation10 + $0x24] sm:$0xf]
        %v1527 = vld [vmem:[#allocation10 + $0x28] sm:$0xf]
        %v1528 = vld [vmem:[#allocation10 + $0x2c] sm:$0xf]
        %v1529 = vld [vmem:[#allocation10 + $0x30] sm:$0xf]
        %v1530 = vld [vmem:[#allocation10 + $0x34] sm:$0xf]
        %v1531 = vld [vmem:[#allocation10 + $0x38] sm:$0xf]
        %v1532 = vld [vmem:[#allocation10 + $0x3c] sm:$0xf]
        %v1533 = vld [vmem:[#allocation10 + $0x40] sm:$0xf]
        %v1534 = vld [vmem:[#allocation10 + $0x44] sm:$0xf]
        %v1535 = vld [vmem:[#allocation10 + $0x48] sm:$0xf]
        %v1536 = vld [vmem:[#allocation10 + $0x4c] sm:$0xf]
        %v1537 = vld [vmem:[#allocation10 + $0x50] sm:$0xf]
        %v1538 = vld [vmem:[#allocation10 + $0x54] sm:$0xf]
        %v1539 = vld [vmem:[#allocation10 + $0x58] sm:$0xf]
        %v1540 = vld [vmem:[#allocation10 + $0x5c] sm:$0xf]
        %v1541 = vld [vmem:[#allocation10 + $0x60] sm:$0xf]
        %v1542 = vld [vmem:[#allocation10 + $0x64] sm:$0xf]
        %v1543 = vld [vmem:[#allocation10 + $0x68] sm:$0xf]
        %v1544 = vld [vmem:[#allocation10 + $0x6c] sm:$0xf]
        %v1545 = vld [vmem:[#allocation10 + $0x70] sm:$0xf]
        %v1546 = vld [vmem:[#allocation10 + $0x74] sm:$0xf]
        %v1547 = vld [vmem:[#allocation10 + $0x78] sm:$0xf]
        %v1548 = vld [vmem:[#allocation10 + $0x7c] sm:$0xf]
        %v1549 = vld [vmem:[#allocation10 + $0x80] sm:$0xf]
        %v1550 = vld [vmem:[#allocation10 + $0x84] sm:$0xf]
        %v1551 = vld [vmem:[#allocation10 + $0x88] sm:$0xf]
        %v1552 = vld [vmem:[#allocation10 + $0x8c] sm:$0xf]
        %v1553 = vld [vmem:[#allocation10 + $0x90] sm:$0xf]
        %v1554 = vld [vmem:[#allocation10 + $0x94] sm:$0xf]
        %v1555 = vld [vmem:[#allocation10 + $0x98] sm:$0xf]
        %v1556 = vld [vmem:[#allocation10 + $0x9c] sm:$0xf]
        %v1557 = vld [vmem:[#allocation10 + $0xa0] sm:$0xf]
        %v1558 = vld [vmem:[#allocation10 + $0xa4] sm:$0xf]
        %v1559 = vld [vmem:[#allocation10 + $0xa8] sm:$0xf]
        %v1560 = vld [vmem:[#allocation10 + $0xac] sm:$0xf]
        %v1561 = vld [vmem:[#allocation10 + $0xb0] sm:$0xf]
        %v1562 = vld [vmem:[#allocation10 + $0xb4] sm:$0xf]
        %v1563 = vld [vmem:[#allocation10 + $0xb8] sm:$0xf]
        %v1564 = vld [vmem:[#allocation10 + $0xbc] sm:$0xf]
        %v1565 = vld [vmem:[#allocation10 + $0xc0] sm:$0xf]
        %v1566 = vld [vmem:[#allocation10 + $0xc4] sm:$0xf]
        %v1567 = vld [vmem:[#allocation10 + $0xc8] sm:$0xf]
        %v1568 = vld [vmem:[#allocation10 + $0xcc] sm:$0xf]
        %v1569 = vld [vmem:[#allocation10 + $0xd0] sm:$0xf]
        %v1570 = vld [vmem:[#allocation10 + $0xd4] sm:$0xf]
        %v1571 = vld [vmem:[#allocation10 + $0xd8] sm:$0xf]
        %v1572 = vld [vmem:[#allocation10 + $0xdc] sm:$0xf]
        %v1573 = vld [vmem:[#allocation10 + $0xe0] sm:$0xf]
        %v1574 = vld [vmem:[#allocation10 + $0xe4] sm:$0xf]
        %v1575 = vld [vmem:[#allocation10 + $0xe8] sm:$0xf]
        %v1576 = vld [vmem:[#allocation10 + $0xec] sm:$0xf]
        %v1577 = vld [vmem:[#allocation10 + $0xf0] sm:$0xf]
        %v1578 = vld [vmem:[#allocation10 + $0xf4] sm:$0xf]
        %v1579 = vld [vmem:[#allocation10 + $0xf8] sm:$0xf]
        %v1580 = vld [vmem:[#allocation10 + $0xfc] sm:$0xf]
        %v1581 = vld [vmem:[#allocation10 + $0x100] sm:$0xf]
        %v1582 = vld [vmem:[#allocation10 + $0x104] sm:$0xf]
        %v1583 = vld [vmem:[#allocation10 + $0x108] sm:$0xf]
        %v1584 = vld [vmem:[#allocation10 + $0x10c] sm:$0xf]
        %v1585 = vld [vmem:[#allocation10 + $0x110] sm:$0xf]
        %v1586 = vld [vmem:[#allocation10 + $0x114] sm:$0xf]
        %v1587 = vld [vmem:[#allocation10 + $0x118] sm:$0xf]
        %v1588 = vld [vmem:[#allocation10 + $0x11c] sm:$0xf]
        %v1589 = vld [vmem:[#allocation10 + $0x120] sm:$0xf]
        %v1590 = vld [vmem:[#allocation10 + $0x124] sm:$0xf]
        %v1591 = vld [vmem:[#allocation10 + $0x128] sm:$0xf]
        %v1592 = vld [vmem:[#allocation10 + $0x12c] sm:$0xf]
        %v1593 = vld [vmem:[#allocation10 + $0x130] sm:$0xf]
        %v1594 = vld [vmem:[#allocation10 + $0x134] sm:$0xf]
        %v1595 = vld [vmem:[#allocation10 + $0x138] sm:$0xf]
        %v1596 = vld [vmem:[#allocation10 + $0x13c] sm:$0xf]
        %v1597 = vld [vmem:[#allocation10 + $0x140] sm:$0xf]
        %v1598 = vld [vmem:[#allocation10 + $0x144] sm:$0xf]
        %v1599 = vld [vmem:[#allocation10 + $0x148] sm:$0xf]
        %v1600 = vld [vmem:[#allocation10 + $0x14c] sm:$0xf]
        %v1601 = vld [vmem:[#allocation10 + $0x150] sm:$0xf]
        %v1602 = vld [vmem:[#allocation10 + $0x154] sm:$0xf]
        %v1603 = vld [vmem:[#allocation10 + $0x158] sm:$0xf]
        %v1604 = vld [vmem:[#allocation10 + $0x15c] sm:$0xf]
        %v1605 = vld [vmem:[#allocation10 + $0x160] sm:$0xf]
        %v1606 = vld [vmem:[#allocation10 + $0x164] sm:$0xf]
        %v1607 = vld [vmem:[#allocation10 + $0x168] sm:$0xf]
        %v1608 = vld [vmem:[#allocation10 + $0x16c] sm:$0xf]
        %v1609 = vld [vmem:[#allocation10 + $0x170] sm:$0xf]
        %v1610 = vld [vmem:[#allocation10 + $0x174] sm:$0xf]
        %v1611 = vld [vmem:[#allocation10 + $0x178] sm:$0xf]
        %v1612 = vld [vmem:[#allocation10 + $0x17c] sm:$0xf]
        %v1613 = vld [vmem:[#allocation10 + $0x180] sm:$0xf]
        %v1614 = vld [vmem:[#allocation10 + $0x184] sm:$0xf]
        %v1615 = vld [vmem:[#allocation10 + $0x188] sm:$0xf]
        %v1616 = vld [vmem:[#allocation10 + $0x18c] sm:$0xf]
        %v1617 = vld [vmem:[#allocation10 + $0x190] sm:$0xf]
        %v1618 = vld [vmem:[#allocation10 + $0x194] sm:$0xf]
        %v1619 = vld [vmem:[#allocation10 + $0x198] sm:$0xf]
        %v1620 = vld [vmem:[#allocation10 + $0x19c] sm:$0xf]
        %v1621 = vld [vmem:[#allocation10 + $0x1a0] sm:$0xf]
        %v1622 = vld [vmem:[#allocation10 + $0x1a4] sm:$0xf]
        %v1623 = vld [vmem:[#allocation10 + $0x1a8] sm:$0xf]
        %v1624 = vld [vmem:[#allocation10 + $0x1ac] sm:$0xf]
        %v1625 = vld [vmem:[#allocation10 + $0x1b0] sm:$0xf]
        %v1626 = vld [vmem:[#allocation10 + $0x1b4] sm:$0xf]
        %v1627 = vld [vmem:[#allocation10 + $0x1b8] sm:$0xf]
        %v1628 = vld [vmem:[#allocation10 + $0x1bc] sm:$0xf]
        %v1629 = vld [vmem:[#allocation10 + $0x1c0] sm:$0xf]
        %v1630 = vld [vmem:[#allocation10 + $0x1c4] sm:$0xf]
        %v1631 = vld [vmem:[#allocation10 + $0x1c8] sm:$0xf]
        %v1632 = vld [vmem:[#allocation10 + $0x1cc] sm:$0xf]
        %v1633 = vld [vmem:[#allocation10 + $0x1d0] sm:$0xf]
        %v1634 = vld [vmem:[#allocation10 + $0x1d4] sm:$0xf]
        %v1635 = vld [vmem:[#allocation10 + $0x1d8] sm:$0xf]
        %v1636 = vld [vmem:[#allocation10 + $0x1dc] sm:$0xf]
        %v1637 = vld [vmem:[#allocation10 + $0x1e0] sm:$0xf]
        %v1638 = vld [vmem:[#allocation10 + $0x1e4] sm:$0xf]
        %v1639 = vld [vmem:[#allocation10 + $0x1e8] sm:$0xf]
        %v1640 = vld [vmem:[#allocation10 + $0x1ec] sm:$0xf]
        %v1641 = vld [vmem:[#allocation10 + $0x1f0] sm:$0xf]
        %v1642 = vld [vmem:[#allocation10 + $0x1f4] sm:$0xf]
        %v1643 = vld [vmem:[#allocation10 + $0x1f8] sm:$0xf]
        %v1644 = vld [vmem:[#allocation10 + $0x1fc] sm:$0xf]
        %v1645 = vld [vmem:[#allocation10 + $0x200] sm:$0xf]
        %v1646 = vld [vmem:[#allocation10 + $0x204] sm:$0xf]
        %v1647 = vld [vmem:[#allocation10 + $0x208] sm:$0xf]
        %v1648 = vld [vmem:[#allocation10 + $0x20c] sm:$0xf]
        %v1649 = vld [vmem:[#allocation10 + $0x210] sm:$0xf]
        %v1650 = vld [vmem:[#allocation10 + $0x214] sm:$0xf]
        %v1651 = vld [vmem:[#allocation10 + $0x218] sm:$0xf]
        %v1652 = vld [vmem:[#allocation10 + $0x21c] sm:$0xf]
        %v1653 = vld [vmem:[#allocation10 + $0x220] sm:$0xf]
        %v1654 = vld [vmem:[#allocation10 + $0x224] sm:$0xf]
        %v1655 = vld [vmem:[#allocation10 + $0x228] sm:$0xf]
        %v1656 = vld [vmem:[#allocation10 + $0x22c] sm:$0xf]
        %v1657 = vld [vmem:[#allocation10 + $0x230] sm:$0xf]
        %v1658 = vld [vmem:[#allocation10 + $0x234] sm:$0xf]
        %v1659 = vld [vmem:[#allocation10 + $0x238] sm:$0xf]
        %v1660 = vld [vmem:[#allocation10 + $0x23c] sm:$0xf]
        %v1661 = vld [vmem:[%s5] sm:$0x1]
        %v1663 = vlaneseq
        %v1664 = vshrl.u32 %v1663, 7
        %v1665 = vsub.s32 0, %v1664
        %v1666 = vrot.slane %v1661, %v1665
        %v1812 = vunpack.c.l.b16 %v1517
        %v1813 = vunpack.c.l.b16 %v1518
        %v1814 = vunpack.c.l.b16 %v1519
        %v1815 = vunpack.c.l.b16 %v1520
        %v1816 = vunpack.c.l.b16 %v1521
        %v1817 = vunpack.c.l.b16 %v1522
        %v1818 = vunpack.c.l.b16 %v1523
        %v1819 = vunpack.c.l.b16 %v1524
        %v1820 = vunpack.c.l.b16 %v1525
        %v1821 = vunpack.c.l.b16 %v1526
        %v1822 = vunpack.c.l.b16 %v1527
        %v1823 = vunpack.c.l.b16 %v1528
        %v1824 = vunpack.c.l.b16 %v1529
        %v1825 = vunpack.c.l.b16 %v1530
        %v1826 = vunpack.c.l.b16 %v1531
        %v1827 = vunpack.c.l.b16 %v1532
        %v1828 = vunpack.c.l.b16 %v1533
        %v1829 = vunpack.c.l.b16 %v1534
        %v1830 = vunpack.c.l.b16 %v1535
        %v1831 = vunpack.c.l.b16 %v1536
        %v1832 = vunpack.c.l.b16 %v1537
        %v1833 = vunpack.c.l.b16 %v1538
        %v1834 = vunpack.c.l.b16 %v1539
        %v1835 = vunpack.c.l.b16 %v1540
        %v1836 = vunpack.c.l.b16 %v1541
        %v1837 = vunpack.c.l.b16 %v1542
        %v1838 = vunpack.c.l.b16 %v1543
        %v1839 = vunpack.c.l.b16 %v1544
        %v1840 = vunpack.c.l.b16 %v1545
        %v1841 = vunpack.c.l.b16 %v1546
        %v1842 = vunpack.c.l.b16 %v1547
        %v1843 = vunpack.c.l.b16 %v1548
        %v1844 = vunpack.c.l.b16 %v1549
        %v1845 = vunpack.c.l.b16 %v1550
        %v1846 = vunpack.c.l.b16 %v1551
        %v1847 = vunpack.c.l.b16 %v1552
        %v1848 = vunpack.c.l.b16 %v1553
        %v1849 = vunpack.c.l.b16 %v1554
        %v1850 = vunpack.c.l.b16 %v1555
        %v1851 = vunpack.c.l.b16 %v1556
        %v1852 = vunpack.c.l.b16 %v1557
        %v1853 = vunpack.c.l.b16 %v1558
        %v1854 = vunpack.c.l.b16 %v1559
        %v1855 = vunpack.c.l.b16 %v1560
        %v1856 = vunpack.c.l.b16 %v1561
        %v1857 = vunpack.c.l.b16 %v1562
        %v1858 = vunpack.c.l.b16 %v1563
        %v1859 = vunpack.c.l.b16 %v1564
        %v1860 = vunpack.c.l.b16 %v1565
        %v1861 = vunpack.c.l.b16 %v1566
        %v1862 = vunpack.c.l.b16 %v1567
        %v1863 = vunpack.c.l.b16 %v1568
        %v1864 = vunpack.c.l.b16 %v1569
        %v1865 = vunpack.c.l.b16 %v1570
        %v1866 = vunpack.c.l.b16 %v1571
        %v1867 = vunpack.c.l.b16 %v1572
        %v1868 = vunpack.c.l.b16 %v1573
        %v1869 = vunpack.c.l.b16 %v1574
        %v1870 = vunpack.c.l.b16 %v1575
        %v1871 = vunpack.c.l.b16 %v1576
        %v1872 = vunpack.c.l.b16 %v1577
        %v1873 = vunpack.c.l.b16 %v1578
        %v1874 = vunpack.c.l.b16 %v1579
        %v1875 = vunpack.c.l.b16 %v1580
        %v1876 = vunpack.c.l.b16 %v1581
        %v1877 = vunpack.c.l.b16 %v1582
        %v1878 = vunpack.c.l.b16 %v1583
        %v1879 = vunpack.c.l.b16 %v1584
        %v1880 = vunpack.c.l.b16 %v1585
        %v1881 = vunpack.c.l.b16 %v1586
        %v1882 = vunpack.c.l.b16 %v1587
        %v1883 = vunpack.c.l.b16 %v1588
        %v1884 = vunpack.c.l.b16 %v1589
        %v1885 = vunpack.c.l.b16 %v1590
        %v1886 = vunpack.c.l.b16 %v1591
        %v1887 = vunpack.c.l.b16 %v1592
        %v1888 = vunpack.c.l.b16 %v1593
        %v1889 = vunpack.c.l.b16 %v1594
        %v1890 = vunpack.c.l.b16 %v1595
        %v1891 = vunpack.c.l.b16 %v1596
        %v1892 = vunpack.c.l.b16 %v1597
        %v1893 = vunpack.c.l.b16 %v1598
        %v1894 = vunpack.c.l.b16 %v1599
        %v1895 = vunpack.c.l.b16 %v1600
        %v1896 = vunpack.c.l.b16 %v1601
        %v1897 = vunpack.c.l.b16 %v1602
        %v1898 = vunpack.c.l.b16 %v1603
        %v1899 = vunpack.c.l.b16 %v1604
        %v1900 = vunpack.c.l.b16 %v1605
        %v1901 = vunpack.c.l.b16 %v1606
        %v1902 = vunpack.c.l.b16 %v1607
        %v1903 = vunpack.c.l.b16 %v1608
        %v1904 = vunpack.c.l.b16 %v1609
        %v1905 = vunpack.c.l.b16 %v1610
        %v1906 = vunpack.c.l.b16 %v1611
        %v1907 = vunpack.c.l.b16 %v1612
        %v1908 = vunpack.c.l.b16 %v1613
        %v1909 = vunpack.c.l.b16 %v1614
        %v1910 = vunpack.c.l.b16 %v1615
        %v1911 = vunpack.c.l.b16 %v1616
        %v1912 = vunpack.c.l.b16 %v1617
        %v1913 = vunpack.c.l.b16 %v1618
        %v1914 = vunpack.c.l.b16 %v1619
        %v1915 = vunpack.c.l.b16 %v1620
        %v1916 = vunpack.c.l.b16 %v1621
        %v1917 = vunpack.c.l.b16 %v1622
        %v1918 = vunpack.c.l.b16 %v1623
        %v1919 = vunpack.c.l.b16 %v1624
        %v1920 = vunpack.c.l.b16 %v1625
        %v1921 = vunpack.c.l.b16 %v1626
        %v1922 = vunpack.c.l.b16 %v1627
        %v1923 = vunpack.c.l.b16 %v1628
        %v1924 = vunpack.c.l.b16 %v1629
        %v1925 = vunpack.c.l.b16 %v1630
        %v1926 = vunpack.c.l.b16 %v1631
        %v1927 = vunpack.c.l.b16 %v1632
        %v1928 = vunpack.c.l.b16 %v1633
        %v1929 = vunpack.c.l.b16 %v1634
        %v1930 = vunpack.c.l.b16 %v1635
        %v1931 = vunpack.c.l.b16 %v1636
        %v1932 = vunpack.c.l.b16 %v1637
        %v1933 = vunpack.c.l.b16 %v1638
        %v1934 = vunpack.c.l.b16 %v1639
        %v1935 = vunpack.c.l.b16 %v1640
        %v1936 = vunpack.c.l.b16 %v1641
        %v1937 = vunpack.c.l.b16 %v1642
        %v1938 = vunpack.c.l.b16 %v1643
        %v1939 = vunpack.c.l.b16 %v1644
        %v1940 = vunpack.c.l.b16 %v1645
        %v1941 = vunpack.c.l.b16 %v1646
        %v1942 = vunpack.c.l.b16 %v1647
        %v1943 = vunpack.c.l.b16 %v1648
        %v1944 = vunpack.c.l.b16 %v1649
        %v1945 = vunpack.c.l.b16 %v1650
        %v1946 = vunpack.c.l.b16 %v1651
        %v1947 = vunpack.c.l.b16 %v1652
        %v1948 = vunpack.c.l.b16 %v1653
        %v1949 = vunpack.c.l.b16 %v1654
        %v1950 = vunpack.c.l.b16 %v1655
        %v1951 = vunpack.c.l.b16 %v1656
        %v1952 = vunpack.c.l.b16 %v1657
        %v1953 = vunpack.c.l.b16 %v1658
        %v1954 = vunpack.c.l.b16 %v1659
        %v1955 = vunpack.c.l.b16 %v1660
        %v1956 = vpack.c.b16 %v1813, %v1812
        %v1957 = vpack.c.b16 %v1815, %v1814
        %v1958 = vpack.c.b16 %v1817, %v1816
        %v1959 = vpack.c.b16 %v1819, %v1818
        %v1960 = vpack.c.b16 %v1821, %v1820
        %v1961 = vpack.c.b16 %v1823, %v1822
        %v1962 = vpack.c.b16 %v1825, %v1824
        %v1963 = vpack.c.b16 %v1827, %v1826
        %v1964 = vpack.c.b16 %v1829, %v1828
        %v1965 = vpack.c.b16 %v1831, %v1830
        %v1966 = vpack.c.b16 %v1833, %v1832
        %v1967 = vpack.c.b16 %v1835, %v1834
        %v1968 = vpack.c.b16 %v1837, %v1836
        %v1969 = vpack.c.b16 %v1839, %v1838
        %v1970 = vpack.c.b16 %v1841, %v1840
        %v1971 = vpack.c.b16 %v1843, %v1842
        %v1972 = vpack.c.b16 %v1845, %v1844
        %v1973 = vpack.c.b16 %v1847, %v1846
        %v1974 = vpack.c.b16 %v1849, %v1848
        %v1975 = vpack.c.b16 %v1851, %v1850
        %v1976 = vpack.c.b16 %v1853, %v1852
        %v1977 = vpack.c.b16 %v1855, %v1854
        %v1978 = vpack.c.b16 %v1857, %v1856
        %v1979 = vpack.c.b16 %v1859, %v1858
        %v1980 = vpack.c.b16 %v1861, %v1860
        %v1981 = vpack.c.b16 %v1863, %v1862
        %v1982 = vpack.c.b16 %v1865, %v1864
        %v1983 = vpack.c.b16 %v1867, %v1866
        %v1984 = vpack.c.b16 %v1869, %v1868
        %v1985 = vpack.c.b16 %v1871, %v1870
        %v1986 = vpack.c.b16 %v1873, %v1872
        %v1987 = vpack.c.b16 %v1875, %v1874
        %v1988 = vpack.c.b16 %v1877, %v1876
        %v1989 = vpack.c.b16 %v1879, %v1878
        %v1990 = vpack.c.b16 %v1881, %v1880
        %v1991 = vpack.c.b16 %v1883, %v1882
        %v1992 = vpack.c.b16 %v1885, %v1884
        %v1993 = vpack.c.b16 %v1887, %v1886
        %v1994 = vpack.c.b16 %v1889, %v1888
        %v1995 = vpack.c.b16 %v1891, %v1890
        %v1996 = vpack.c.b16 %v1893, %v1892
        %v1997 = vpack.c.b16 %v1895, %v1894
        %v1998 = vpack.c.b16 %v1897, %v1896
        %v1999 = vpack.c.b16 %v1899, %v1898
        %v2000 = vpack.c.b16 %v1901, %v1900
        %v2001 = vpack.c.b16 %v1903, %v1902
        %v2002 = vpack.c.b16 %v1905, %v1904
        %v2003 = vpack.c.b16 %v1907, %v1906
        %v2004 = vpack.c.b16 %v1909, %v1908
        %v2005 = vpack.c.b16 %v1911, %v1910
        %v2006 = vpack.c.b16 %v1913, %v1912
        %v2007 = vpack.c.b16 %v1915, %v1914
        %v2008 = vpack.c.b16 %v1917, %v1916
        %v2009 = vpack.c.b16 %v1919, %v1918
        %v2010 = vpack.c.b16 %v1921, %v1920
        %v2011 = vpack.c.b16 %v1923, %v1922
        %v2012 = vpack.c.b16 %v1925, %v1924
        %v2013 = vpack.c.b16 %v1927, %v1926
        %v2014 = vpack.c.b16 %v1929, %v1928
        %v2015 = vpack.c.b16 %v1931, %v1930
        %v2016 = vpack.c.b16 %v1933, %v1932
        %v2017 = vpack.c.b16 %v1935, %v1934
        %v2018 = vpack.c.b16 %v1937, %v1936
        %v2019 = vpack.c.b16 %v1939, %v1938
        %v2020 = vpack.c.b16 %v1941, %v1940
        %v2021 = vpack.c.b16 %v1943, %v1942
        %v2022 = vpack.c.b16 %v1945, %v1944
        %v2023 = vpack.c.b16 %v1947, %v1946
        %v2024 = vpack.c.b16 %v1949, %v1948
        %v2025 = vpack.c.b16 %v1951, %v1950
        %v2026 = vpack.c.b16 %v1953, %v1952
        %v2027 = vpack.c.b16 %v1955, %v1954
        %2100 = vmatprep.subr.bf16.mxu0 0
        %2101 = vmatpush1.bf16.msra.mxu0 %v1956
        %2102 = vmatprep.subr.bf16.mxu0 0
        %2103 = vmatpush1.bf16.msra.mxu0 %v1957
        %2104 = vmatprep.subr.bf16.mxu0 0
        %2105 = vmatpush1.bf16.msra.mxu0 %v1958
        %2106 = vmatprep.subr.bf16.mxu0 0
        %2107 = vmatpush1.bf16.msra.mxu0 %v1959
        %2108 = vmatprep.subr.bf16.mxu0 0
        %2109 = vmatpush1.bf16.msra.mxu0 %v1960
        %2110 = vmatprep.subr.bf16.mxu0 0
        %2111 = vmatpush1.bf16.msra.mxu0 %v1961
        %2112 = vmatprep.subr.bf16.mxu0 0
        %2113 = vmatpush1.bf16.msra.mxu0 %v1962
        %2114 = vmatprep.subr.bf16.mxu0 0
        %2115 = vmatpush1.bf16.msra.mxu0 %v1963
        %2116 = vmatprep.subr.bf16.mxu0 0
        %2117 = vmatpush1.bf16.msra.mxu0 %v1964
        %2118 = vmatprep.subr.bf16.mxu0 0
        %2119 = vmatpush1.bf16.msra.mxu0 %v1965
        %2120 = vmatprep.subr.bf16.mxu0 0
        %2121 = vmatpush1.bf16.msra.mxu0 %v1966
        %2122 = vmatprep.subr.bf16.mxu0 0
        %2123 = vmatpush1.bf16.msra.mxu0 %v1967
        %2124 = vmatprep.subr.bf16.mxu0 0
        %2125 = vmatpush1.bf16.msra.mxu0 %v1968
        %2126 = vmatprep.subr.bf16.mxu0 0
        %2127 = vmatpush1.bf16.msra.mxu0 %v1969
        %2128 = vmatprep.subr.bf16.mxu0 0
        %2129 = vmatpush1.bf16.msra.mxu0 %v1970
        %2130 = vmatprep.subr.bf16.mxu0 0
        %2131 = vmatpush1.bf16.msra.mxu0 %v1971
        %2132 = vmatprep.mubr.bf16.mxu0 %v1446
        %2133 = vmatmul.mubr.bf16.gmra.mrb[0].mxu0 %v1445
        %v2134 = vpop.f32.mrb[0].mxu0
        %v2135 = vadd.f32 %v1666, %v2134
        %v2136 = vpop.f32.mrb[0].mxu0
        %v2137 = vpop.f32.mrb[0].mxu0
        %v2138 = vadd.f32 %v1666, %v2137
        %v2139 = vpop.f32.mrb[0].mxu0
        %2140 = vmatprep.mubr.bf16.mxu0 %v1455
        %2141 = vmatmul.mubr.bf16.gmra.mrb[0].mxu0 %v1454
        %v2142 = vpop.f32.mrb[0].mxu0
        %v2143 = vadd.f32 %v1666, %v2142
        %v2144 = vpop.f32.mrb[0].mxu0
        %v2145 = vpop.f32.mrb[0].mxu0
        %v2146 = vadd.f32 %v1666, %v2145
        %v2147 = vpop.f32.mrb[0].mxu0
        %2148 = vmatprep.mubr.bf16.mxu0 %v1464
        %2149 = vmatmul.mubr.bf16.gmra.mrb[0].mxu0 %v1463
        %v2150 = vpop.f32.mrb[0].mxu0
        %v2151 = vadd.f32 %v1666, %v2150
        %v2152 = vpop.f32.mrb[0].mxu0
        %v2153 = vpop.f32.mrb[0].mxu0
        %v2154 = vadd.f32 %v1666, %v2153
        %v2155 = vpop.f32.mrb[0].mxu0
        %2156 = vmatprep.mubr.bf16.mxu0 %v1473
        %2157 = vmatmul.mubr.bf16.gmra.mrb[0].mxu0 %v1472
        %v2158 = vpop.f32.mrb[0].mxu0
        %v2159 = vadd.f32 %v1666, %v2158
        %v2160 = vpop.f32.mrb[0].mxu0
        %v2161 = vpop.f32.mrb[0].mxu0
        %v2162 = vadd.f32 %v1666, %v2161
        %v2163 = vpop.f32.mrb[0].mxu0
        %2164 = vmatprep.mubr.bf16.mxu0 %v1482
        %2165 = vmatmul.mubr.bf16.gmra.mrb[0].mxu0 %v1481
        %v2166 = vpop.f32.mrb[0].mxu0
        %v2167 = vadd.f32 %v1666, %v2166
        %v2168 = vpop.f32.mrb[0].mxu0
        %v2169 = vpop.f32.mrb[0].mxu0
        %v2170 = vadd.f32 %v1666, %v2169
        %v2171 = vpop.f32.mrb[0].mxu0
        %2172 = vmatprep.mubr.bf16.mxu0 %v1491
        %2173 = vmatmul.mubr.bf16.gmra.mrb[0].mxu0 %v1490
        %v2174 = vpop.f32.mrb[0].mxu0
        %v2175 = vadd.f32 %v1666, %v2174
        %v2176 = vpop.f32.mrb[0].mxu0
        %v2177 = vpop.f32.mrb[0].mxu0
        %v2178 = vadd.f32 %v1666, %v2177
        %v2179 = vpop.f32.mrb[0].mxu0
        %2180 = vmatprep.mubr.bf16.mxu0 %v1500
        %2181 = vmatmul.mubr.bf16.gmra.mrb[0].mxu0 %v1499
        %v2182 = vpop.f32.mrb[0].mxu0
        %v2183 = vadd.f32 %v1666, %v2182
        %v2184 = vpop.f32.mrb[0].mxu0
        %v2185 = vpop.f32.mrb[0].mxu0
        %v2186 = vadd.f32 %v1666, %v2185
        %v2187 = vpop.f32.mrb[0].mxu0
        %2188 = vmatprep.mubr.bf16.mxu0 %v1509
        %2189 = vmatmul.mubr.bf16.gmra.mrb[0].mxu0 %v1508
        %v2190 = vpop.f32.mrb[0].mxu0
        %v2191 = vadd.f32 %v1666, %v2190
        %v2192 = vpop.f32.mrb[0].mxu0
        %v2193 = vpop.f32.mrb[0].mxu0
        %v2194 = vadd.f32 %v1666, %v2193
        %v2195 = vpop.f32.mrb[0].mxu0
        %2196 = vdwg.mxu0
        %2197 = vmatprep.subr.bf16.mxu0 0
        %2198 = vmatpush1.bf16.msra.mxu0 %v1972
        %2199 = vmatprep.subr.bf16.mxu0 0
        %2200 = vmatpush1.bf16.msra.mxu0 %v1973
        %2201 = vmatprep.subr.bf16.mxu0 0
        %2202 = vmatpush1.bf16.msra.mxu0 %v1974
        %2203 = vmatprep.subr.bf16.mxu0 0
        %2204 = vmatpush1.bf16.msra.mxu0 %v1975
        %2205 = vmatprep.subr.bf16.mxu0 0
        %2206 = vmatpush1.bf16.msra.mxu0 %v1976
        %2207 = vmatprep.subr.bf16.mxu0 0
        %2208 = vmatpush1.bf16.msra.mxu0 %v1977
        %2209 = vmatprep.subr.bf16.mxu0 0
        %2210 = vmatpush1.bf16.msra.mxu0 %v1978
        %2211 = vmatprep.subr.bf16.mxu0 0
        %2212 = vmatpush1.bf16.msra.mxu0 %v1979
        %2213 = vmatprep.subr.bf16.mxu0 0
        %2214 = vmatpush1.bf16.msra.mxu0 %v1980
        %2215 = vmatprep.subr.bf16.mxu0 0
        %2216 = vmatpush1.bf16.msra.mxu0 %v1981
        %2217 = vmatprep.subr.bf16.mxu0 0
        %2218 = vmatpush1.bf16.msra.mxu0 %v1982
        %2219 = vmatprep.subr.bf16.mxu0 0
        %2220 = vmatpush1.bf16.msra.mxu0 %v1983
        %2221 = vmatprep.subr.bf16.mxu0 0
        %2222 = vmatpush1.bf16.msra.mxu0 %v1984
        %2223 = vmatprep.subr.bf16.mxu0 0
        %2224 = vmatpush1.bf16.msra.mxu0 %v1985
        %2225 = vmatprep.subr.bf16.mxu0 0
        %2226 = vmatpush1.bf16.msra.mxu0 %v1986
        %2227 = vmatprep.subr.bf16.mxu0 0
        %2228 = vmatpush1.bf16.msra.mxu0 %v1987
        %2229 = vmatprep.mubr.bf16.mxu0 %v1448
        %2230 = vmatmul.mubr.bf16.gmra.mrb[0].mxu0 %v1447
        %v2231 = vpop.f32.mrb[0].mxu0
        %v2232 = vadd.f32 %v2135, %v2231
        %v2233 = vpop.f32.mrb[0].mxu0
        %v2234 = vpop.f32.mrb[0].mxu0
        %v2235 = vadd.f32 %v2138, %v2234
        %v2236 = vpop.f32.mrb[0].mxu0
        %2237 = vmatprep.mubr.bf16.mxu0 %v1457
        %2238 = vmatmul.mubr.bf16.gmra.mrb[0].mxu0 %v1456
        %v2239 = vpop.f32.mrb[0].mxu0
        %v2240 = vadd.f32 %v2143, %v2239
        %v2241 = vpop.f32.mrb[0].mxu0
        %v2242 = vpop.f32.mrb[0].mxu0
        %v2243 = vadd.f32 %v2146, %v2242
        %v2244 = vpop.f32.mrb[0].mxu0
        %2245 = vmatprep.mubr.bf16.mxu0 %v1466
        %2246 = vmatmul.mubr.bf16.gmra.mrb[0].mxu0 %v1465
        %v2247 = vpop.f32.mrb[0].mxu0
        %v2248 = vadd.f32 %v2151, %v2247
        %v2249 = vpop.f32.mrb[0].mxu0
        %v2250 = vpop.f32.mrb[0].mxu0
        %v2251 = vadd.f32 %v2154, %v2250
        %v2252 = vpop.f32.mrb[0].mxu0
        %2253 = vmatprep.mubr.bf16.mxu0 %v1475
        %2254 = vmatmul.mubr.bf16.gmra.mrb[0].mxu0 %v1474
        %v2255 = vpop.f32.mrb[0].mxu0
        %v2256 = vadd.f32 %v2159, %v2255
        %v2257 = vpop.f32.mrb[0].mxu0
        %v2258 = vpop.f32.mrb[0].mxu0
        %v2259 = vadd.f32 %v2162, %v2258
        %v2260 = vpop.f32.mrb[0].mxu0
        %2261 = vmatprep.mubr.bf16.mxu0 %v1484
        %2262 = vmatmul.mubr.bf16.gmra.mrb[0].mxu0 %v1483
        %v2263 = vpop.f32.mrb[0].mxu0
        %v2264 = vadd.f32 %v2167, %v2263
        %v2265 = vpop.f32.mrb[0].mxu0
        %v2266 = vpop.f32.mrb[0].mxu0
        %v2267 = vadd.f32 %v2170, %v2266
        %v2268 = vpop.f32.mrb[0].mxu0
        %2269 = vmatprep.mubr.bf16.mxu0 %v1493
        %2270 = vmatmul.mubr.bf16.gmra.mrb[0].mxu0 %v1492
        %v2271 = vpop.f32.mrb[0].mxu0
        %v2272 = vadd.f32 %v2175, %v2271
        %v2273 = vpop.f32.mrb[0].mxu0
        %v2274 = vpop.f32.mrb[0].mxu0
        %v2275 = vadd.f32 %v2178, %v2274
        %v2276 = vpop.f32.mrb[0].mxu0
        %2277 = vmatprep.mubr.bf16.mxu0 %v1502
        %2278 = vmatmul.mubr.bf16.gmra.mrb[0].mxu0 %v1501
        %v2279 = vpop.f32.mrb[0].mxu0
        %v2280 = vadd.f32 %v2183, %v2279
        %v2281 = vpop.f32.mrb[0].mxu0
        %v2282 = vpop.f32.mrb[0].mxu0
        %v2283 = vadd.f32 %v2186, %v2282
        %v2284 = vpop.f32.mrb[0].mxu0
        %2285 = vmatprep.mubr.bf16.mxu0 %v1511
        %2286 = vmatmul.mubr.bf16.gmra.mrb[0].mxu0 %v1510
        %v2287 = vpop.f32.mrb[0].mxu0
        %v2288 = vadd.f32 %v2191, %v2287
        %v2289 = vpop.f32.mrb[0].mxu0
        %v2290 = vpop.f32.mrb[0].mxu0
        %v2291 = vadd.f32 %v2194, %v2290
        %v2292 = vpop.f32.mrb[0].mxu0
        %2293 = vdwg.mxu0
        %2294 = vmatprep.subr.bf16.mxu0 0
        %2295 = vmatpush1.bf16.msra.mxu0 %v1988
        %2296 = vmatprep.subr.bf16.mxu0 0
        %2297 = vmatpush1.bf16.msra.mxu0 %v1989
        %2298 = vmatprep.subr.bf16.mxu0 0
        %2299 = vmatpush1.bf16.msra.mxu0 %v1990
        %2300 = vmatprep.subr.bf16.mxu0 0
        %2301 = vmatpush1.bf16.msra.mxu0 %v1991
        %2302 = vmatprep.subr.bf16.mxu0 0
        %2303 = vmatpush1.bf16.msra.mxu0 %v1992
        %2304 = vmatprep.subr.bf16.mxu0 0
        %2305 = vmatpush1.bf16.msra.mxu0 %v1993
        %2306 = vmatprep.subr.bf16.mxu0 0
        %2307 = vmatpush1.bf16.msra.mxu0 %v1994
        %2308 = vmatprep.subr.bf16.mxu0 0
        %2309 = vmatpush1.bf16.msra.mxu0 %v1995
        %2310 = vmatprep.subr.bf16.mxu0 0
        %2311 = vmatpush1.bf16.msra.mxu0 %v1996
        %2312 = vmatprep.subr.bf16.mxu0 0
        %2313 = vmatpush1.bf16.msra.mxu0 %v1997
        %2314 = vmatprep.subr.bf16.mxu0 0
        %2315 = vmatpush1.bf16.msra.mxu0 %v1998
        %2316 = vmatprep.subr.bf16.mxu0 0
        %2317 = vmatpush1.bf16.msra.mxu0 %v1999
        %2318 = vmatprep.subr.bf16.mxu0 0
        %2319 = vmatpush1.bf16.msra.mxu0 %v2000
        %2320 = vmatprep.subr.bf16.mxu0 0
        %2321 = vmatpush1.bf16.msra.mxu0 %v2001
        %2322 = vmatprep.subr.bf16.mxu0 0
        %2323 = vmatpush1.bf16.msra.mxu0 %v2002
        %2324 = vmatprep.subr.bf16.mxu0 0
        %2325 = vmatpush1.bf16.msra.mxu0 %v2003
        %2326 = vmatprep.mubr.bf16.mxu0 %v1450
        %2327 = vmatmul.mubr.bf16.gmra.mrb[0].mxu0 %v1449
        %v2328 = vpop.f32.mrb[0].mxu0
        %v2329 = vadd.f32 %v2232, %v2328
        %v2330 = vpop.f32.mrb[0].mxu0
        %v2331 = vpop.f32.mrb[0].mxu0
        %v2332 = vadd.f32 %v2235, %v2331
        %v2333 = vpop.f32.mrb[0].mxu0
        %2334 = vmatprep.mubr.bf16.mxu0 %v1459
        %2335 = vmatmul.mubr.bf16.gmra.mrb[0].mxu0 %v1458
        %v2336 = vpop.f32.mrb[0].mxu0
        %v2337 = vadd.f32 %v2240, %v2336
        %v2338 = vpop.f32.mrb[0].mxu0
        %v2339 = vpop.f32.mrb[0].mxu0
        %v2340 = vadd.f32 %v2243, %v2339
        %v2341 = vpop.f32.mrb[0].mxu0
        %2342 = vmatprep.mubr.bf16.mxu0 %v1468
        %2343 = vmatmul.mubr.bf16.gmra.mrb[0].mxu0 %v1467
        %v2344 = vpop.f32.mrb[0].mxu0
        %v2345 = vadd.f32 %v2248, %v2344
        %v2346 = vpop.f32.mrb[0].mxu0
        %v2347 = vpop.f32.mrb[0].mxu0
        %v2348 = vadd.f32 %v2251, %v2347
        %v2349 = vpop.f32.mrb[0].mxu0
        %2350 = vmatprep.mubr.bf16.mxu0 %v1477
        %2351 = vmatmul.mubr.bf16.gmra.mrb[0].mxu0 %v1476
        %v2352 = vpop.f32.mrb[0].mxu0
        %v2353 = vadd.f32 %v2256, %v2352
        %v2354 = vpop.f32.mrb[0].mxu0
        %v2355 = vpop.f32.mrb[0].mxu0
        %v2356 = vadd.f32 %v2259, %v2355
        %v2357 = vpop.f32.mrb[0].mxu0
        %2358 = vmatprep.mubr.bf16.mxu0 %v1486
        %2359 = vmatmul.mubr.bf16.gmra.mrb[0].mxu0 %v1485
        %v2360 = vpop.f32.mrb[0].mxu0
        %v2361 = vadd.f32 %v2264, %v2360
        %v2362 = vpop.f32.mrb[0].mxu0
        %v2363 = vpop.f32.mrb[0].mxu0
        %v2364 = vadd.f32 %v2267, %v2363
        %v2365 = vpop.f32.mrb[0].mxu0
        %2366 = vmatprep.mubr.bf16.mxu0 %v1495
        %2367 = vmatmul.mubr.bf16.gmra.mrb[0].mxu0 %v1494
        %v2368 = vpop.f32.mrb[0].mxu0
        %v2369 = vadd.f32 %v2272, %v2368
        %v2370 = vpop.f32.mrb[0].mxu0
        %v2371 = vpop.f32.mrb[0].mxu0
        %v2372 = vadd.f32 %v2275, %v2371
        %v2373 = vpop.f32.mrb[0].mxu0
        %2374 = vmatprep.mubr.bf16.mxu0 %v1504
        %2375 = vmatmul.mubr.bf16.gmra.mrb[0].mxu0 %v1503
        %v2376 = vpop.f32.mrb[0].mxu0
        %v2377 = vadd.f32 %v2280, %v2376
        %v2378 = vpop.f32.mrb[0].mxu0
        %v2379 = vpop.f32.mrb[0].mxu0
        %v2380 = vadd.f32 %v2283, %v2379
        %v2381 = vpop.f32.mrb[0].mxu0
        %2382 = vmatprep.mubr.bf16.mxu0 %v1513
        %2383 = vmatmul.mubr.bf16.gmra.mrb[0].mxu0 %v1512
        %v2384 = vpop.f32.mrb[0].mxu0
        %v2385 = vadd.f32 %v2288, %v2384
        %v2386 = vpop.f32.mrb[0].mxu0
        %v2387 = vpop.f32.mrb[0].mxu0
        %v2388 = vadd.f32 %v2291, %v2387
        %v2389 = vpop.f32.mrb[0].mxu0
        %2390 = vdwg.mxu0
        %2391 = vmatprep.subr.bf16.mxu0 0
        %2392 = vmatpush1.bf16.msra.mxu0 %v2004
        %2393 = vmatprep.subr.bf16.mxu0 0
        %2394 = vmatpush1.bf16.msra.mxu0 %v2005
        %2395 = vmatprep.subr.bf16.mxu0 0
        %2396 = vmatpush1.bf16.msra.mxu0 %v2006
        %2397 = vmatprep.subr.bf16.mxu0 0
        %2398 = vmatpush1.bf16.msra.mxu0 %v2007
        %2399 = vmatprep.subr.bf16.mxu0 0
        %2400 = vmatpush1.bf16.msra.mxu0 %v2008
        %2401 = vmatprep.subr.bf16.mxu0 0
        %2402 = vmatpush1.bf16.msra.mxu0 %v2009
        %2403 = vmatprep.subr.bf16.mxu0 0
        %2404 = vmatpush1.bf16.msra.mxu0 %v2010
        %2405 = vmatprep.subr.bf16.mxu0 0
        %2406 = vmatpush1.bf16.msra.mxu0 %v2011
        %2407 = vmatprep.subr.bf16.mxu0 0
        %2408 = vmatpush1.bf16.msra.mxu0 %v2012
        %2409 = vmatprep.subr.bf16.mxu0 0
        %2410 = vmatpush1.bf16.msra.mxu0 %v2013
        %2411 = vmatprep.subr.bf16.mxu0 0
        %2412 = vmatpush1.bf16.msra.mxu0 %v2014
        %2413 = vmatprep.subr.bf16.mxu0 0
        %2414 = vmatpush1.bf16.msra.mxu0 %v2015
        %2415 = vmatprep.subr.bf16.mxu0 0
        %2416 = vmatpush1.bf16.msra.mxu0 %v2016
        %2417 = vmatprep.subr.bf16.mxu0 0
        %2418 = vmatpush1.bf16.msra.mxu0 %v2017
        %2419 = vmatprep.subr.bf16.mxu0 0
        %2420 = vmatpush1.bf16.msra.mxu0 %v2018
        %2421 = vmatprep.subr.bf16.mxu0 0
        %2422 = vmatpush1.bf16.msra.mxu0 %v2019
        %2423 = vmatprep.mubr.bf16.mxu0 %v1452
        %2424 = vmatmul.mubr.bf16.gmra.mrb[0].mxu0 %v1451
        %v2425 = vpop.f32.mrb[0].mxu0
        %v2426 = vadd.f32 %v2329, %v2425
        %v2427 = vpop.f32.mrb[0].mxu0
        %v2428 = vpop.f32.mrb[0].mxu0
        %v2429 = vadd.f32 %v2332, %v2428
        %v2430 = vpop.f32.mrb[0].mxu0
        %2431 = vmatprep.mubr.bf16.mxu0 %v1461
        %2432 = vmatmul.mubr.bf16.gmra.mrb[0].mxu0 %v1460
        %v2433 = vpop.f32.mrb[0].mxu0
        %v2434 = vadd.f32 %v2337, %v2433
        %v2435 = vpop.f32.mrb[0].mxu0
        %v2436 = vpop.f32.mrb[0].mxu0
        %v2437 = vadd.f32 %v2340, %v2436
        %v2438 = vpop.f32.mrb[0].mxu0
        %2439 = vmatprep.mubr.bf16.mxu0 %v1470
        %2440 = vmatmul.mubr.bf16.gmra.mrb[0].mxu0 %v1469
        %v2441 = vpop.f32.mrb[0].mxu0
        %v2442 = vadd.f32 %v2345, %v2441
        %v2443 = vpop.f32.mrb[0].mxu0
        %v2444 = vpop.f32.mrb[0].mxu0
        %v2445 = vadd.f32 %v2348, %v2444
        %v2446 = vpop.f32.mrb[0].mxu0
        %2447 = vmatprep.mubr.bf16.mxu0 %v1479
        %2448 = vmatmul.mubr.bf16.gmra.mrb[0].mxu0 %v1478
        %v2449 = vpop.f32.mrb[0].mxu0
        %v2450 = vadd.f32 %v2353, %v2449
        %v2451 = vpop.f32.mrb[0].mxu0
        %v2452 = vpop.f32.mrb[0].mxu0
        %v2453 = vadd.f32 %v2356, %v2452
        %v2454 = vpop.f32.mrb[0].mxu0
        %2455 = vmatprep.mubr.bf16.mxu0 %v1488
        %2456 = vmatmul.mubr.bf16.gmra.mrb[0].mxu0 %v1487
        %v2457 = vpop.f32.mrb[0].mxu0
        %v2458 = vadd.f32 %v2361, %v2457
        %v2459 = vpop.f32.mrb[0].mxu0
        %v2460 = vpop.f32.mrb[0].mxu0
        %v2461 = vadd.f32 %v2364, %v2460
        %v2462 = vpop.f32.mrb[0].mxu0
        %2463 = vmatprep.mubr.bf16.mxu0 %v1497
        %2464 = vmatmul.mubr.bf16.gmra.mrb[0].mxu0 %v1496
        %v2465 = vpop.f32.mrb[0].mxu0
        %v2466 = vadd.f32 %v2369, %v2465
        %v2467 = vpop.f32.mrb[0].mxu0
        %v2468 = vpop.f32.mrb[0].mxu0
        %v2469 = vadd.f32 %v2372, %v2468
        %v2470 = vpop.f32.mrb[0].mxu0
        %2471 = vmatprep.mubr.bf16.mxu0 %v1506
        %2472 = vmatmul.mubr.bf16.gmra.mrb[0].mxu0 %v1505
        %v2473 = vpop.f32.mrb[0].mxu0
        %v2474 = vadd.f32 %v2377, %v2473
        %v2475 = vpop.f32.mrb[0].mxu0
        %v2476 = vpop.f32.mrb[0].mxu0
        %v2477 = vadd.f32 %v2380, %v2476
        %v2478 = vpop.f32.mrb[0].mxu0
        %2479 = vmatprep.mubr.bf16.mxu0 %v1515
        %2480 = vmatmul.mubr.bf16.gmra.mrb[0].mxu0 %v1514
        %v2481 = vpop.f32.mrb[0].mxu0
        %v2482 = vadd.f32 %v2385, %v2481
        %v2483 = vpop.f32.mrb[0].mxu0
        %v2484 = vpop.f32.mrb[0].mxu0
        %v2485 = vadd.f32 %v2388, %v2484
        %v2486 = vpop.f32.mrb[0].mxu0
        %2487 = vdwg.mxu0
        %2488 = vmatprep.subr.bf16.mxu0 0
        %2489 = vmatpush1.bf16.msra.mxu0 %v2020
        %2490 = vmatprep.subr.bf16.mxu0 0
        %2491 = vmatpush1.bf16.msra.mxu0 %v2021
        %2492 = vmatprep.subr.bf16.mxu0 0
        %2493 = vmatpush1.bf16.msra.mxu0 %v2022
        %2494 = vmatprep.subr.bf16.mxu0 0
        %2495 = vmatpush1.bf16.msra.mxu0 %v2023
        %2496 = vmatprep.subr.bf16.mxu0 0
        %2497 = vmatpush1.bf16.msra.mxu0 %v2024
        %2498 = vmatprep.subr.bf16.mxu0 0
        %2499 = vmatpush1.bf16.msra.mxu0 %v2025
        %2500 = vmatprep.subr.bf16.mxu0 0
        %2501 = vmatpush1.bf16.msra.mxu0 %v2026
        %2502 = vmatprep.subr.bf16.mxu0 0
        %2503 = vmatpush1.bf16.msra.mxu0 %v2027
        %2504 = vmatprep.subr.bf16.mxu0 0
        %2505 = vmatpush1.bf16.msra.mxu0 0
        %2506 = vmatprep.subr.bf16.mxu0 0
        %2507 = vmatpush1.bf16.msra.mxu0 0
        %2508 = vmatprep.subr.bf16.mxu0 0
        %2509 = vmatpush1.bf16.msra.mxu0 0
        %2510 = vmatprep.subr.bf16.mxu0 0
        %2511 = vmatpush1.bf16.msra.mxu0 0
        %2512 = vmatprep.subr.bf16.mxu0 0
        %2513 = vmatpush1.bf16.msra.mxu0 0
        %2514 = vmatprep.subr.bf16.mxu0 0
        %2515 = vmatpush1.bf16.msra.mxu0 0
        %2516 = vmatprep.subr.bf16.mxu0 0
        %2517 = vmatpush1.bf16.msra.mxu0 0
        %2518 = vmatprep.subr.bf16.mxu0 0
        %2519 = vmatpush1.bf16.msra.mxu0 0
        %2520 = vmatprep.mubr.bf16.mxu0 0
        %2521 = vmatmul.mubr.bf16.gmra.mrb[0].mxu0 %v1453
        %v2522 = vpop.f32.mrb[0].mxu0
        %v2523 = vadd.f32 %v2426, %v2522
        %v2524 = vpop.f32.mrb[0].mxu0
        %v2525 = vpop.f32.mrb[0].mxu0
        %v2526 = vadd.f32 %v2429, %v2525
        %v2527 = vpop.f32.mrb[0].mxu0
        %2528 = vmatprep.mubr.bf16.mxu0 0
        %2529 = vmatmul.mubr.bf16.gmra.mrb[0].mxu0 %v1462
        %v2530 = vpop.f32.mrb[0].mxu0
        %v2531 = vadd.f32 %v2434, %v2530
        %v2532 = vpop.f32.mrb[0].mxu0
        %v2533 = vpop.f32.mrb[0].mxu0
        %v2534 = vadd.f32 %v2437, %v2533
        %v2535 = vpop.f32.mrb[0].mxu0
        %2536 = vmatprep.mubr.bf16.mxu0 0
        %2537 = vmatmul.mubr.bf16.gmra.mrb[0].mxu0 %v1471
        %v2538 = vpop.f32.mrb[0].mxu0
        %v2539 = vadd.f32 %v2442, %v2538
        %v2540 = vpop.f32.mrb[0].mxu0
        %v2541 = vpop.f32.mrb[0].mxu0
        %v2542 = vadd.f32 %v2445, %v2541
        %v2543 = vpop.f32.mrb[0].mxu0
        %2544 = vmatprep.mubr.bf16.mxu0 0
        %2545 = vmatmul.mubr.bf16.gmra.mrb[0].mxu0 %v1480
        %v2546 = vpop.f32.mrb[0].mxu0
        %v2547 = vadd.f32 %v2450, %v2546
        %v2548 = vpop.f32.mrb[0].mxu0
        %v2549 = vpop.f32.mrb[0].mxu0
        %v2550 = vadd.f32 %v2453, %v2549
        %v2551 = vpop.f32.mrb[0].mxu0
        %2552 = vmatprep.mubr.bf16.mxu0 0
        %2553 = vmatmul.mubr.bf16.gmra.mrb[0].mxu0 %v1489
        %v2554 = vpop.f32.mrb[0].mxu0
        %v2555 = vadd.f32 %v2458, %v2554
        %v2556 = vpop.f32.mrb[0].mxu0
        %v2557 = vpop.f32.mrb[0].mxu0
        %v2558 = vadd.f32 %v2461, %v2557
        %v2559 = vpop.f32.mrb[0].mxu0
        %2560 = vmatprep.mubr.bf16.mxu0 0
        %2561 = vmatmul.mubr.bf16.gmra.mrb[0].mxu0 %v1498
        %v2562 = vpop.f32.mrb[0].mxu0
        %v2563 = vadd.f32 %v2466, %v2562
        %v2564 = vpop.f32.mrb[0].mxu0
        %v2565 = vpop.f32.mrb[0].mxu0
        %v2566 = vadd.f32 %v2469, %v2565
        %v2567 = vpop.f32.mrb[0].mxu0
        %2568 = vmatprep.mubr.bf16.mxu0 0
        %2569 = vmatmul.mubr.bf16.gmra.mrb[0].mxu0 %v1507
        %v2570 = vpop.f32.mrb[0].mxu0
        %v2571 = vadd.f32 %v2474, %v2570
        %v2572 = vpop.f32.mrb[0].mxu0
        %v2573 = vpop.f32.mrb[0].mxu0
        %v2574 = vadd.f32 %v2477, %v2573
        %v2575 = vpop.f32.mrb[0].mxu0
        %2576 = vmatprep.mubr.bf16.mxu0 0
        %2577 = vmatmul.mubr.bf16.gmra.mrb[0].mxu0 %v1516
        %v2578 = vpop.f32.mrb[0].mxu0
        %v2579 = vadd.f32 %v2482, %v2578
        %v2580 = vpop.f32.mrb[0].mxu0
        %v2581 = vpop.f32.mrb[0].mxu0
        %v2582 = vadd.f32 %v2485, %v2581
        %v2583 = vpop.f32.mrb[0].mxu0
        %2584 = vdwg.mxu0
        %vm2585 = vcmp.gt.f32.partialorder %v2523, 0.0
        %vm2586 = vcmp.gt.f32.partialorder %v2526, 0.0
        %vm2587 = vcmp.gt.f32.partialorder %v2531, 0.0
        %vm2588 = vcmp.gt.f32.partialorder %v2534, 0.0
        %vm2589 = vcmp.gt.f32.partialorder %v2539, 0.0
        %vm2590 = vcmp.gt.f32.partialorder %v2542, 0.0
        %vm2591 = vcmp.gt.f32.partialorder %v2547, 0.0
        %vm2592 = vcmp.gt.f32.partialorder %v2550, 0.0
        %vm2593 = vcmp.gt.f32.partialorder %v2555, 0.0
        %vm2594 = vcmp.gt.f32.partialorder %v2558, 0.0
        %vm2595 = vcmp.gt.f32.partialorder %v2563, 0.0
        %vm2596 = vcmp.gt.f32.partialorder %v2566, 0.0
        %vm2597 = vcmp.gt.f32.partialorder %v2571, 0.0
        %vm2598 = vcmp.gt.f32.partialorder %v2574, 0.0
        %vm2599 = vcmp.gt.f32.partialorder %v2579, 0.0
        %vm2600 = vcmp.gt.f32.partialorder %v2582, 0.0
        %v2601 = vmul.f32 %v2523, 0.1
        %v2602 = vmul.f32 %v2526, 0.1
        %v2603 = vmul.f32 %v2531, 0.1
        %v2604 = vmul.f32 %v2534, 0.1
        %v2605 = vmul.f32 %v2539, 0.1
        %v2606 = vmul.f32 %v2542, 0.1
        %v2607 = vmul.f32 %v2547, 0.1
        %v2608 = vmul.f32 %v2550, 0.1
        %v2609 = vmul.f32 %v2555, 0.1
        %v2610 = vmul.f32 %v2558, 0.1
        %v2611 = vmul.f32 %v2563, 0.1
        %v2612 = vmul.f32 %v2566, 0.1
        %v2613 = vmul.f32 %v2571, 0.1
        %v2614 = vmul.f32 %v2574, 0.1
        %v2615 = vmul.f32 %v2579, 0.1
        %v2616 = vmul.f32 %v2582, 0.1
        %v2617 = vsel %vm2585, %v2523, %v2601
        %v2618 = vsel %vm2586, %v2526, %v2602
        %v2619 = vsel %vm2587, %v2531, %v2603
        %v2620 = vsel %vm2588, %v2534, %v2604
        %v2621 = vsel %vm2589, %v2539, %v2605
        %v2622 = vsel %vm2590, %v2542, %v2606
        %v2623 = vsel %vm2591, %v2547, %v2607
        %v2624 = vsel %vm2592, %v2550, %v2608
        %v2625 = vsel %vm2593, %v2555, %v2609
        %v2626 = vsel %vm2594, %v2558, %v2610
        %v2627 = vsel %vm2595, %v2563, %v2611
        %v2628 = vsel %vm2596, %v2566, %v2612
        %v2629 = vsel %vm2597, %v2571, %v2613
        %v2630 = vsel %vm2598, %v2574, %v2614
        %v2631 = vsel %vm2599, %v2579, %v2615
        %v2632 = vsel %vm2600, %v2582, %v2616
        %v2633 = vunpack.c.l.bf16 %v364
        %v2634 = vunpack.c.l.bf16 %v365
        %v2635 = vunpack.c.l.bf16 %v366
        %v2636 = vunpack.c.l.bf16 %v367
        %v2637 = vunpack.c.l.bf16 %v368
        %v2638 = vunpack.c.l.bf16 %v369
        %v2639 = vunpack.c.l.bf16 %v370
        %v2640 = vunpack.c.l.bf16 %v371
        %v2641 = vunpack.c.l.bf16 %v372
        %v2642 = vunpack.c.l.bf16 %v373
        %v2643 = vunpack.c.l.bf16 %v374
        %v2644 = vunpack.c.l.bf16 %v375
        %v2645 = vunpack.c.l.bf16 %v376
        %v2646 = vunpack.c.l.bf16 %v377
        %v2647 = vunpack.c.l.bf16 %v378
        %v2648 = vunpack.c.l.bf16 %v379
        %v2649 = vadd.f32 %v2633, %v2617
        %v2650 = vadd.f32 %v2634, %v2618
        %v2651 = vadd.f32 %v2635, %v2619
        %v2652 = vadd.f32 %v2636, %v2620
        %v2653 = vadd.f32 %v2637, %v2621
        %v2654 = vadd.f32 %v2638, %v2622
        %v2655 = vadd.f32 %v2639, %v2623
        %v2656 = vadd.f32 %v2640, %v2624
        %v2657 = vadd.f32 %v2641, %v2625
        %v2658 = vadd.f32 %v2642, %v2626
        %v2659 = vadd.f32 %v2643, %v2627
        %v2660 = vadd.f32 %v2644, %v2628
        %v2661 = vadd.f32 %v2645, %v2629
        %v2662 = vadd.f32 %v2646, %v2630
        %v2663 = vadd.f32 %v2647, %v2631
        %v2664 = vadd.f32 %v2648, %v2632
        %2665 = vst [vmem:[%s360] sm:$0xff] %v2649
        %2666 = vst [vmem:[%s360 + $0x8] sm:$0xff] %v2650
        %2667 = vst [vmem:[%s360 + $0x10] sm:$0xff] %v2651
        %2668 = vst [vmem:[%s360 + $0x18] sm:$0xff] %v2652
        %2669 = vst [vmem:[%s360 + $0x20] sm:$0xff] %v2653
        %2670 = vst [vmem:[%s360 + $0x28] sm:$0xff] %v2654
        %2671 = vst [vmem:[%s360 + $0x30] sm:$0xff] %v2655
        %2672 = vst [vmem:[%s360 + $0x38] sm:$0xff] %v2656
        %2673 = vst [vmem:[%s360 + $0x40] sm:$0xff] %v2657
        %2674 = vst [vmem:[%s360 + $0x48] sm:$0xff] %v2658
        %2675 = vst [vmem:[%s360 + $0x50] sm:$0xff] %v2659
        %2676 = vst [vmem:[%s360 + $0x58] sm:$0xff] %v2660
        %2677 = vst [vmem:[%s360 + $0x60] sm:$0xff] %v2661
        %2678 = vst [vmem:[%s360 + $0x68] sm:$0xff] %v2662
        %2679 = vst [vmem:[%s360 + $0x70] sm:$0xff] %v2663
        %2680 = vst [vmem:[%s360 + $0x78] sm:$0xff] %v2664
        %s2681 = sand.u32 %s189, 1
        %s2682 = scalar_lea.sflag [#allocation6], %s2681
        %s2683 = sand.u32 %s189, 1
        %s2684 = smul.addr %s2683, 128
        %s2685 = scalar_lea.vmem [#allocation12], %s2684
        // Predicated region
        $region61: #{tpu_custom_call.1} parent=43 // pred_check
          %p2686 = pneg %p199
        $region62: #{tpu_custom_call.1} parent=43 // pred_check_branch
          %2688 = sbr.rel (%p2686) target = $region64
        $region63: #{tpu_custom_call.1} parent=43 // pred_region
          %s2689 = smul.u32 16, %s32
          %s2691 = ssub.s32 2048, 2048
          %2692 = vsyncadd %s2682, %s2691
          %s2693 = smul.addr %s31, 32
          %s2694 = sadd.s32 %s2689, %s2693
          %s2695 = smul.addr %s2694, 128
          %s2696 = scalar_lea.hbm %s6, %s2695
          %s2697 = sshll.u32 %s2685, 4
          %s2698 = int_to_ptr.vmem [resolvable:$true] %s2697
          %2703 = dma.vmem_to_hbm [thread:$0]  %s2698, 2048, %s2696, %s2682, 128, 128, 8
        $region64: #{tpu_custom_call.1} parent=43 // pred_fallthru
          _
      $region44: #{tpu_custom_call.1} parent=5 // pred_fallthru
        _
      %p2704 = scmp.le.s32.totalorder 2, %s22
      // Predicated region
      $region65: #{tpu_custom_call.1} parent=5 // pred_check
        %p2705 = pneg %p2704
      $region66: #{tpu_custom_call.1} parent=5 // pred_check_branch
        %2707 = sbr.rel (%p2705) target = $region68
      $region67: #{tpu_custom_call.1} parent=5 // pred_region
        %s2708 = ssub.s32 %s22, 2
        // Predicated region
        $region69: #{tpu_custom_call.1} parent=67 // pred_check
          %p2709 = pneg %p205
        $region70: #{tpu_custom_call.1} parent=67 // pred_check_branch
          %2711 = sbr.rel (%p2709) target = $region72
        $region71: #{tpu_custom_call.1} parent=67 // pred_region
          %s2712 = sand.u32 %s190, 1
          %s2713 = scalar_lea.sflag [#allocation6], %s2712
          %s2714 = sand.u32 %s190, 1
          %s2715 = smul.addr %s2714, 128
          %s2716 = scalar_lea.vmem [#allocation12], %s2715
          %2717 = dma.done %s2713, 2048
        $region72: #{tpu_custom_call.1} parent=67 // pred_fallthru
          _
      $region68: #{tpu_custom_call.1} parent=5 // pred_fallthru
        _
    $region6: #{tpu_custom_call.1} parent=1 // loop_footer
      %s26 = sadd.s32 1, %s22
    $region7: #{tpu_custom_call.1} parent=1 // loop_footer_branch
      %21 = sbr.rel target = $region3
    $region8: #{tpu_custom_call.1} parent=1 // loop_exit
      _
    %2718 = vsyncpa [#allocation5], 1
    %s2719 = scalar_lea.sflag [#allocation5], 1
    %2720 = vsyncpa %s2719, 1
    %2721 = vsyncpa [#allocation8], 1
    %s2722 = scalar_lea.sflag [#allocation8], 1
    %2723 = vsyncpa %s2722, 1
    %2724 = vsyncpa [#allocation11], 1
    %2725 = vsyncpa [#allocation6], 1
    %s2726 = scalar_lea.sflag [#allocation6], 1
    %2727 = vsyncpa %s2726, 1

</llo_original>
